<compile_context>
chip_gen: v7x
topology: tpu7x:2x2x1
jax: 0.10.0
libtpu: 0.0.40
codegen_flags: <defaults>
</compile_context>

<pallas_src>
import jax
import jax.numpy as jnp
import numpy as np
from jax.experimental import pallas as pl
from jax.experimental.pallas import tpu as pltpu


BPAD = 8   # batch padded to a full sublane group


# ---------------------------------------------------------------------------
# The fused Pallas kernel
# ---------------------------------------------------------------------------

def lenet_kernel(lhs1_ref, w1_ref, b1_ref, w2_ref, b2_ref,
                 fw1_ref, fb1_ref, fw2_ref, fb2_ref, fw3_ref, fb3_ref, o_ref):
    """Whole LeNet forward on VMEM-resident data.

    layouts (bp = BPAD):
      lhs1: (28*bp, 160) bf16, rows=(p, e, hh, b), lanes=(ki, w32)   [prebuilt im2col]
      w1:   (160, 256) bf16, rows=(ki, w32), cols = parity*128 + (pw14*6 + c6)
      w2:   (640, 256) bf16, rows = ki*128 + (w14*6 + c6), cols = parity*128 + (pw5*16 + c16)
      fw1:  (640, 128) bf16, rows = h5*128 + (w5*16 + c16), cols padded to 128
      fw2:  (128, 128) bf16; fw3: (128, 128) bf16 (2 real output lanes)
      o:    (bp, 128) f32; caller keeps [:B, :2]
    """
    bp = o_ref.shape[0]

    # ---- Stage 1: Conv2d(1,6,5) + MaxPool2d(2) + bias + ReLU -> one MXU matmul ----
    r1 = jnp.dot(lhs1_ref[...], w1_ref[...],
                 preferred_element_type=jnp.float32)            # (28*bp, 256)
    c1 = jnp.maximum(r1[:, :128], r1[:, 128:])                  # pool cols (parity halves)
    n = 7 * bp
    y1 = jnp.concatenate([jnp.maximum(c1[0:n], c1[n:2 * n]),    # pool rows (branch e)
                          jnp.maximum(c1[2 * n:3 * n], c1[3 * n:4 * n])], axis=0)
    y1 = jnp.maximum(y1 + b1_ref[...], 0.0).astype(jnp.bfloat16)
    # y1: (14*bp, 128) bf16, rows=(p, hh, b), lanes = w14*6 + c6 (valid 0..83)

    # ---- Stage 2: Conv2d(6,16,5) + MaxPool2d(2) + bias + ReLU -> one MXU matmul ----
    def s2_rows(e):
        slabs = []
        for i in range(5):                       # kernel row offset
            s = e + i                            # y1 row h = 2*hh + s
            p, t = s % 2, s // 2
            r0 = (p * 7 + t) * bp
            slabs.append(y1[r0:r0 + 5 * bp, :])  # (5*bp, 128), rows = (hh, b)
        return jnp.concatenate(slabs, axis=1)    # (5*bp, 640), 128-lane aligned concat

    lhs2 = jnp.concatenate([s2_rows(0), s2_rows(1)], axis=0)    # (10*bp, 640) bf16
    r2 = jnp.dot(lhs2, w2_ref[...],
                 preferred_element_type=jnp.float32)            # (10*bp, 256)
    c2 = jnp.maximum(r2[:, :128], r2[:, 128:])                  # pool cols
    m = 5 * bp
    y2 = jnp.maximum(c2[0:m], c2[m:2 * m])                      # pool rows
    y2 = jnp.maximum(y2 + b2_ref[...], 0.0).astype(jnp.bfloat16)
    # y2: (5*bp, 128) bf16, rows=(h5, b), lanes = w5*16 + c16 (valid 0..79)

    # ---- Flatten (128-aligned lane concat; fc1 rows pre-permuted/padded) + MLP ----
    xf = jnp.concatenate([y2[k * bp:(k + 1) * bp, :] for k in range(5)], axis=1)
    h1 = jnp.maximum(jnp.dot(xf, fw1_ref[...], preferred_element_type=jnp.float32)
                     + fb1_ref[...], 0.0).astype(jnp.bfloat16)           # (bp, 128)
    h2 = jnp.maximum(jnp.dot(h1, fw2_ref[...], preferred_element_type=jnp.float32)
                     + fb2_ref[...], 0.0).astype(jnp.bfloat16)           # (bp, 128)
    o_ref[...] = jnp.dot(h2, fw3_ref[...],
                         preferred_element_type=jnp.float32) + fb3_ref[...]


def _vmem_spec():
    return pl.BlockSpec(memory_space=pltpu.MemorySpace.VMEM)


# ---------------------------------------------------------------------------
# One-time parameter repacking (outside the kernel)
# ---------------------------------------------------------------------------

def prepare_params(params):
    (cw1, cb1, cw2, cb2, fw1, fb1, fw2, fb2, fw3, fb3) = params

    # conv1 -> block-Toeplitz: rows (ki, w32); cols = parity*128 + (pw14*6 + c6)
    i_idx = jnp.arange(5)[:, None, None]
    s_idx = jnp.arange(32)[None, :, None]
    ow_idx = jnp.arange(28)[None, None, :]
    j = s_idx - ow_idx
    valid = (j >= 0) & (j < 5)
    t1 = jnp.where(valid[..., None], cw1[i_idx, jnp.clip(j, 0, 4), 0, :], 0.0)  # (5,32,28,6)
    t1 = t1.reshape(5, 32, 14, 2, 6).transpose(0, 1, 3, 2, 4).reshape(5, 32, 2, 84)
    w1big = jnp.zeros((5, 32, 2, 128), jnp.float32).at[..., :84].set(t1)
    w1big = w1big.reshape(160, 256).astype(jnp.bfloat16)
    b1t = jnp.zeros((1, 128), jnp.float32).at[0, :84].set(jnp.tile(cb1, 14))

    # conv2 -> block-Toeplitz: rows = ki*128 + (w14*6 + c6); cols = parity*128 + (pw5*16 + c16)
    i_idx = jnp.arange(5)[:, None, None]
    s_idx = jnp.arange(14)[None, :, None]
    ow_idx = jnp.arange(10)[None, None, :]
    j = s_idx - ow_idx
    valid = (j >= 0) & (j < 5)
    t2 = jnp.where(valid[..., None, None], cw2[i_idx, jnp.clip(j, 0, 4), :, :], 0.0)  # (5,14,10,6,16)
    t2 = t2.reshape(5, 14, 5, 2, 6, 16).transpose(0, 1, 4, 3, 2, 5)   # (i, s, ci, v, Q, co)
    t2 = t2.reshape(5, 84, 2, 80)
    w2big = jnp.zeros((5, 128, 2, 128), jnp.float32).at[:, :84, :, :80].set(t2)
    w2big = w2big.reshape(640, 256).astype(jnp.bfloat16)
    b2t = jnp.zeros((1, 128), jnp.float32).at[0, :80].set(jnp.tile(cb2, 5))

    # fc1: permute rows from PyTorch flatten order (c16, h5, w5) to the kernel's
    # lane order h5*128 + (w5*16 + c16); pad cols to 128.
    fw1r = fw1.reshape(16, 5, 5, 120).transpose(1, 2, 0, 3).reshape(5, 80, 120)
    fw1p = jnp.zeros((5, 128, 128), jnp.float32).at[:, :80, :120].set(fw1r)
    fw1p = fw1p.reshape(640, 128).astype(jnp.bfloat16)
    fb1p = jnp.zeros((1, 128), jnp.float32).at[0, :120].set(fb1)

    fw2p = jnp.zeros((128, 128), jnp.float32).at[:120, :84].set(fw2).astype(jnp.bfloat16)
    fb2p = jnp.zeros((1, 128), jnp.float32).at[0, :84].set(fb2)
    # fc3: pad the 2 output lanes to 128 for a dense store; sliced off outside.
    fw3p = jnp.zeros((128, 128), jnp.float32).at[:84, :2].set(fw3).astype(jnp.bfloat16)
    fb3p = jnp.zeros((1, 128), jnp.float32).at[0, :2].set(fb3)
    return (w1big, b1t, w2big, b2t, fw1p, fb1p, fw2p, fb2p, fw3p, fb3p)


def prepare_inputs(x_nchw):
    """(B,1,32,32) f32 -> stage-1 im2col LHS (28*BPAD, 160) bf16.

    Rows = (pool-row parity p, pool branch e, pooled row hh, batch b);
    lanes = (ki, w32).  Input row fetched: h = 4*hh + 2*p + e + ki.
    """
    b = x_nchw.shape[0]
    assert b <= BPAD
    x = x_nchw[:, 0, :, :]                                   # (B, 32, 32)
    x = jnp.pad(x, ((0, BPAD - b), (0, 0), (0, 0)))          # (BPAD, 32, 32)
    p = jnp.arange(2)
    e = jnp.arange(2)
    hh = jnp.arange(7)
    ki = jnp.arange(5)
    h_idx = (4 * hh[None, None, :, None] + 2 * p[:, None, None, None]
             + e[None, :, None, None] + ki[None, None, None, :])   # (2,2,7,5)
    lhs = x[:, h_idx, :]                                     # (BPAD, 2, 2, 7, 5, 32)
    lhs = jnp.transpose(lhs, (1, 2, 3, 0, 4, 5))             # (p, e, hh, b, ki, w)
    return lhs.reshape(4 * 7 * BPAD, 5 * 32).astype(jnp.bfloat16)


# ---------------------------------------------------------------------------
# Full forward pass: one pallas_call
# ---------------------------------------------------------------------------

def net_forward(x_nchw, kparams):
    b = x_nchw.shape[0]
    lhs1 = prepare_inputs(x_nchw)
    out = pl.pallas_call(
        lenet_kernel,
        out_shape=jax.ShapeDtypeStruct((BPAD, 128), jnp.float32),
        in_specs=[_vmem_spec()] * 11,
        out_specs=_vmem_spec(),
    )(lhs1, *kparams)
    return out[:b, :2]


# ---------------------------------------------------------------------------
# Deterministic parameters + pure-JAX reference
# ---------------------------------------------------------------------------

def init_params(key):
    ks = jax.random.split(key, 10)

    def unif(k, shape, fan_in):
        bound = 1.0 / float(np.sqrt(fan_in))
        return jax.random.uniform(k, shape, jnp.float32, -bound, bound)

    cw1 = unif(ks[0], (5, 5, 1, 6), 25)       # conv1 weight, HWIO
    cb1 = unif(ks[1], (6,), 25)
    cw2 = unif(ks[2], (5, 5, 6, 16), 150)     # conv2 weight, HWIO
    cb2 = unif(ks[3], (16,), 150)
    fw1 = unif(ks[4], (400, 120), 400)        # Linear weights (in, out)
    fb1 = unif(ks[5], (120,), 400)
    fw2 = unif(ks[6], (120, 84), 120)
    fb2 = unif(ks[7], (84,), 120)
    fw3 = unif(ks[8], (84, 2), 84)
    fb3 = unif(ks[9], (2,), 84)
    return (cw1, cb1, cw2, cb2, fw1, fb1, fw2, fb2, fw3, fb3)


def ref_forward(x_nchw, params):
    (cw1, cb1, cw2, cb2, fw1, fb1, fw2, fb2, fw3, fb3) = params

    def conv(x, w, bias):
        y = jax.lax.conv_general_dilated(
            x, w, (1, 1), 'VALID', dimension_numbers=('NCHW', 'HWIO', 'NCHW'))
        return jnp.maximum(y + bias[None, :, None, None], 0.0)

    def pool(x):
        return jax.lax.reduce_window(x, -jnp.inf, jax.lax.max,
                                     (1, 1, 2, 2), (1, 1, 2, 2), 'VALID')

    y = pool(conv(x_nchw, cw1, cb1))
    y = pool(conv(y, cw2, cb2))
    y = y.reshape(y.shape[0], -1)
    y = jnp.maximum(y @ fw1 + fb1, 0.0)
    y = jnp.maximum(y @ fw2 + fb2, 0.0)
    return y @ fw3 + fb3


if __name__ == "__main__":
    key = jax.random.PRNGKey(0)
    kx, kp = jax.random.split(key)

    # LeNet input: NCHW (B=2, C=1, 32, 32) so that 16*5*5 = 400 features reach Flatten.
    x = jax.random.normal(kx, (2, 1, 32, 32), jnp.float32)
    params = init_params(kp)

    kparams = prepare_params(params)          # one-time weight repack (host/XLA-side)
    out = jax.jit(net_forward)(x, kparams)
    out = jax.block_until_ready(out)
    assert out.shape == (2, 2)

    ref = ref_forward(x, params)
    np.testing.assert_allclose(np.asarray(out), np.asarray(ref), rtol=2e-2, atol=2e-2)

    print("KERNEL_OK")
</pallas_src>

<mosaic_0001>
module attributes {stable_mosaic.version = 11 : i64} {
  func.func @lenet_kernel(%arg0: memref<224x160xbf16, #tpu.memory_space<vmem>>, %arg1: memref<160x256xbf16, #tpu.memory_space<vmem>>, %arg2: memref<1x128xf32, #tpu.memory_space<vmem>>, %arg3: memref<640x256xbf16, #tpu.memory_space<vmem>>, %arg4: memref<1x128xf32, #tpu.memory_space<vmem>>, %arg5: memref<640x128xbf16, #tpu.memory_space<vmem>>, %arg6: memref<1x128xf32, #tpu.memory_space<vmem>>, %arg7: memref<128x128xbf16, #tpu.memory_space<vmem>>, %arg8: memref<1x128xf32, #tpu.memory_space<vmem>>, %arg9: memref<128x128xbf16, #tpu.memory_space<vmem>>, %arg10: memref<1x128xf32, #tpu.memory_space<vmem>>, %arg11: memref<8x128xf32, #tpu.memory_space<vmem>>) attributes {dimension_semantics = [], scalar_prefetch = 0 : i64, scratch_operands = 0 : i64, tpu.core_type = #tpu.core_type<tc>} {
    %c0 = arith.constant 0 : index
    %c0_0 = arith.constant 0 : index
    %0 = vector.load %arg0[%c0, %c0_0] : memref<224x160xbf16, #tpu.memory_space<vmem>>, vector<224x160xbf16>
    %c0_1 = arith.constant 0 : index
    %c0_2 = arith.constant 0 : index
    %1 = vector.load %arg1[%c0_1, %c0_2] : memref<160x256xbf16, #tpu.memory_space<vmem>>, vector<160x256xbf16>
    %cst = arith.constant dense<0.000000e+00> : vector<224x256xf32>
    %2 = tpu.matmul %0, %1, %cst {dimension_numbers = #tpu.dot_dimension_numbers<[1], [0], [0], [1], [0, 0, 1, 1], [], []>} : vector<224x160xbf16>, vector<160x256xbf16>, vector<224x256xf32> -> vector<224x256xf32>
    %3 = vector.extract_strided_slice %2 {offsets = [0, 0], sizes = [224, 128], strides = [1, 1]} : vector<224x256xf32> to vector<224x128xf32>
    %4 = vector.extract_strided_slice %2 {offsets = [0, 128], sizes = [224, 128], strides = [1, 1]} : vector<224x256xf32> to vector<224x128xf32>
    %5 = arith.maximumf %3, %4 : vector<224x128xf32>
    %6 = vector.extract_strided_slice %5 {offsets = [0, 0], sizes = [56, 128], strides = [1, 1]} : vector<224x128xf32> to vector<56x128xf32>
    %7 = vector.extract_strided_slice %5 {offsets = [56, 0], sizes = [56, 128], strides = [1, 1]} : vector<224x128xf32> to vector<56x128xf32>
    %8 = arith.maximumf %6, %7 : vector<56x128xf32>
    %9 = vector.extract_strided_slice %5 {offsets = [112, 0], sizes = [56, 128], strides = [1, 1]} : vector<224x128xf32> to vector<56x128xf32>
    %10 = vector.extract_strided_slice %5 {offsets = [168, 0], sizes = [56, 128], strides = [1, 1]} : vector<224x128xf32> to vector<56x128xf32>
    %11 = arith.maximumf %9, %10 : vector<56x128xf32>
    %12 = tpu.concatenate %8, %11 in 0 : vector<56x128xf32>, vector<56x128xf32> -> vector<112x128xf32>
    %c0_3 = arith.constant 0 : index
    %c0_4 = arith.constant 0 : index
    %13 = vector.load %arg2[%c0_3, %c0_4] : memref<1x128xf32, #tpu.memory_space<vmem>>, vector<1x128xf32>
    %14 = vector.broadcast %13 : vector<1x128xf32> to vector<112x128xf32>
    %15 = arith.addf %12, %14 : vector<112x128xf32>
    %cst_5 = arith.constant 0.000000e+00 : f32
    %16 = vector.broadcast %cst_5 : f32 to vector<112x128xf32>
    %17 = arith.maximumf %15, %16 : vector<112x128xf32>
    %18 = arith.truncf %17 : vector<112x128xf32> to vector<112x128xbf16>
    %19 = vector.extract_strided_slice %18 {offsets = [0, 0], sizes = [40, 128], strides = [1, 1]} : vector<112x128xbf16> to vector<40x128xbf16>
    %20 = vector.extract_strided_slice %18 {offsets = [56, 0], sizes = [40, 128], strides = [1, 1]} : vector<112x128xbf16> to vector<40x128xbf16>
    %21 = vector.extract_strided_slice %18 {offsets = [8, 0], sizes = [40, 128], strides = [1, 1]} : vector<112x128xbf16> to vector<40x128xbf16>
    %22 = vector.extract_strided_slice %18 {offsets = [64, 0], sizes = [40, 128], strides = [1, 1]} : vector<112x128xbf16> to vector<40x128xbf16>
    %23 = vector.extract_strided_slice %18 {offsets = [16, 0], sizes = [40, 128], strides = [1, 1]} : vector<112x128xbf16> to vector<40x128xbf16>
    %24 = tpu.concatenate %19, %20, %21, %22, %23 in 1 : vector<40x128xbf16>, vector<40x128xbf16>, vector<40x128xbf16>, vector<40x128xbf16>, vector<40x128xbf16> -> vector<40x640xbf16>
    %25 = vector.extract_strided_slice %18 {offsets = [56, 0], sizes = [40, 128], strides = [1, 1]} : vector<112x128xbf16> to vector<40x128xbf16>
    %26 = vector.extract_strided_slice %18 {offsets = [8, 0], sizes = [40, 128], strides = [1, 1]} : vector<112x128xbf16> to vector<40x128xbf16>
    %27 = vector.extract_strided_slice %18 {offsets = [64, 0], sizes = [40, 128], strides = [1, 1]} : vector<112x128xbf16> to vector<40x128xbf16>
    %28 = vector.extract_strided_slice %18 {offsets = [16, 0], sizes = [40, 128], strides = [1, 1]} : vector<112x128xbf16> to vector<40x128xbf16>
    %29 = vector.extract_strided_slice %18 {offsets = [72, 0], sizes = [40, 128], strides = [1, 1]} : vector<112x128xbf16> to vector<40x128xbf16>
    %30 = tpu.concatenate %25, %26, %27, %28, %29 in 1 : vector<40x128xbf16>, vector<40x128xbf16>, vector<40x128xbf16>, vector<40x128xbf16>, vector<40x128xbf16> -> vector<40x640xbf16>
    %31 = tpu.concatenate %24, %30 in 0 : vector<40x640xbf16>, vector<40x640xbf16> -> vector<80x640xbf16>
    %c0_6 = arith.constant 0 : index
    %c0_7 = arith.constant 0 : index
    %32 = vector.load %arg3[%c0_6, %c0_7] : memref<640x256xbf16, #tpu.memory_space<vmem>>, vector<640x256xbf16>
    %cst_8 = arith.constant dense<0.000000e+00> : vector<80x256xf32>
    %33 = tpu.matmul %31, %32, %cst_8 {dimension_numbers = #tpu.dot_dimension_numbers<[1], [0], [0], [1], [0, 0, 1, 1], [], []>} : vector<80x640xbf16>, vector<640x256xbf16>, vector<80x256xf32> -> vector<80x256xf32>
    %34 = vector.extract_strided_slice %33 {offsets = [0, 0], sizes = [80, 128], strides = [1, 1]} : vector<80x256xf32> to vector<80x128xf32>
    %35 = vector.extract_strided_slice %33 {offsets = [0, 128], sizes = [80, 128], strides = [1, 1]} : vector<80x256xf32> to vector<80x128xf32>
    %36 = arith.maximumf %34, %35 : vector<80x128xf32>
    %37 = vector.extract_strided_slice %36 {offsets = [0, 0], sizes = [40, 128], strides = [1, 1]} : vector<80x128xf32> to vector<40x128xf32>
    %38 = vector.extract_strided_slice %36 {offsets = [40, 0], sizes = [40, 128], strides = [1, 1]} : vector<80x128xf32> to vector<40x128xf32>
    %39 = arith.maximumf %37, %38 : vector<40x128xf32>
    %c0_9 = arith.constant 0 : index
    %c0_10 = arith.constant 0 : index
    %40 = vector.load %arg4[%c0_9, %c0_10] : memref<1x128xf32, #tpu.memory_space<vmem>>, vector<1x128xf32>
    %41 = vector.broadcast %40 : vector<1x128xf32> to vector<40x128xf32>
    %42 = arith.addf %39, %41 : vector<40x128xf32>
    %cst_11 = arith.constant 0.000000e+00 : f32
    %43 = vector.broadcast %cst_11 : f32 to vector<40x128xf32>
    %44 = arith.maximumf %42, %43 : vector<40x128xf32>
    %45 = arith.truncf %44 : vector<40x128xf32> to vector<40x128xbf16>
    %46 = vector.extract_strided_slice %45 {offsets = [0, 0], sizes = [8, 128], strides = [1, 1]} : vector<40x128xbf16> to vector<8x128xbf16>
    %47 = vector.extract_strided_slice %45 {offsets = [8, 0], sizes = [8, 128], strides = [1, 1]} : vector<40x128xbf16> to vector<8x128xbf16>
    %48 = vector.extract_strided_slice %45 {offsets = [16, 0], sizes = [8, 128], strides = [1, 1]} : vector<40x128xbf16> to vector<8x128xbf16>
    %49 = vector.extract_strided_slice %45 {offsets = [24, 0], sizes = [8, 128], strides = [1, 1]} : vector<40x128xbf16> to vector<8x128xbf16>
    %50 = vector.extract_strided_slice %45 {offsets = [32, 0], sizes = [8, 128], strides = [1, 1]} : vector<40x128xbf16> to vector<8x128xbf16>
    %51 = tpu.concatenate %46, %47, %48, %49, %50 in 1 : vector<8x128xbf16>, vector<8x128xbf16>, vector<8x128xbf16>, vector<8x128xbf16>, vector<8x128xbf16> -> vector<8x640xbf16>
    %c0_12 = arith.constant 0 : index
    %c0_13 = arith.constant 0 : index
    %52 = vector.load %arg5[%c0_12, %c0_13] : memref<640x128xbf16, #tpu.memory_space<vmem>>, vector<640x128xbf16>
    %cst_14 = arith.constant dense<0.000000e+00> : vector<8x128xf32>
    %53 = tpu.matmul %51, %52, %cst_14 {dimension_numbers = #tpu.dot_dimension_numbers<[1], [0], [0], [1], [0, 0, 1, 1], [], []>} : vector<8x640xbf16>, vector<640x128xbf16>, vector<8x128xf32> -> vector<8x128xf32>
    %c0_15 = arith.constant 0 : index
    %c0_16 = arith.constant 0 : index
    %54 = vector.load %arg6[%c0_15, %c0_16] : memref<1x128xf32, #tpu.memory_space<vmem>>, vector<1x128xf32>
    %55 = vector.broadcast %54 : vector<1x128xf32> to vector<8x128xf32>
    %56 = arith.addf %53, %55 : vector<8x128xf32>
    %cst_17 = arith.constant 0.000000e+00 : f32
    %57 = vector.broadcast %cst_17 : f32 to vector<8x128xf32>
    %58 = arith.maximumf %56, %57 : vector<8x128xf32>
    %59 = arith.truncf %58 : vector<8x128xf32> to vector<8x128xbf16>
    %c0_18 = arith.constant 0 : index
    %c0_19 = arith.constant 0 : index
    %60 = vector.load %arg7[%c0_18, %c0_19] : memref<128x128xbf16, #tpu.memory_space<vmem>>, vector<128x128xbf16>
    %cst_20 = arith.constant dense<0.000000e+00> : vector<8x128xf32>
    %61 = tpu.matmul %59, %60, %cst_20 {dimension_numbers = #tpu.dot_dimension_numbers<[1], [0], [0], [1], [0, 0, 1, 1], [], []>} : vector<8x128xbf16>, vector<128x128xbf16>, vector<8x128xf32> -> vector<8x128xf32>
    %c0_21 = arith.constant 0 : index
    %c0_22 = arith.constant 0 : index
    %62 = vector.load %arg8[%c0_21, %c0_22] : memref<1x128xf32, #tpu.memory_space<vmem>>, vector<1x128xf32>
    %63 = vector.broadcast %62 : vector<1x128xf32> to vector<8x128xf32>
    %64 = arith.addf %61, %63 : vector<8x128xf32>
    %cst_23 = arith.constant 0.000000e+00 : f32
    %65 = vector.broadcast %cst_23 : f32 to vector<8x128xf32>
    %66 = arith.maximumf %64, %65 : vector<8x128xf32>
    %67 = arith.truncf %66 : vector<8x128xf32> to vector<8x128xbf16>
    %c0_24 = arith.constant 0 : index
    %c0_25 = arith.constant 0 : index
    %68 = vector.load %arg9[%c0_24, %c0_25] : memref<128x128xbf16, #tpu.memory_space<vmem>>, vector<128x128xbf16>
    %cst_26 = arith.constant dense<0.000000e+00> : vector<8x128xf32>
    %69 = tpu.matmul %67, %68, %cst_26 {dimension_numbers = #tpu.dot_dimension_numbers<[1], [0], [0], [1], [0, 0, 1, 1], [], []>} : vector<8x128xbf16>, vector<128x128xbf16>, vector<8x128xf32> -> vector<8x128xf32>
    %c0_27 = arith.constant 0 : index
    %c0_28 = arith.constant 0 : index
    %70 = vector.load %arg10[%c0_27, %c0_28] : memref<1x128xf32, #tpu.memory_space<vmem>>, vector<1x128xf32>
    %71 = vector.broadcast %70 : vector<1x128xf32> to vector<8x128xf32>
    %72 = arith.addf %69, %71 : vector<8x128xf32>
    %c0_29 = arith.constant 0 : index
    %c0_30 = arith.constant 0 : index
    %73 = vector.load %arg11[%c0_29, %c0_30] : memref<8x128xf32, #tpu.memory_space<vmem>>, vector<8x128xf32>
    tpu.vector_store %arg11[%c0_29, %c0_30], %72 {strides = array<i32>} : memref<8x128xf32, #tpu.memory_space<vmem>>, vector<8x128xf32>,
    return
  }
}

</mosaic_0001>

<llo_original>
// kernel: net_forward.1
$region0: #{net_forward.1}
  #allocation0 [shape = 'u32[]', space=smem, size = 0x4, offset = 0x4, fixed_abs, tag = 'smem constant byte address 0x4 - core index']
  #allocation1 [shape = 'u32[144,128]{1,0:T(1,128)}', space=vmem, size = 0x12000, scoped, tag = 'internal scratch']
  %s0 = inlined_call_operand.vmem [shape: bf16[224,160], index: 0, kind: input, shape index: {}]
  %s1 = inlined_call_operand.vmem [shape: bf16[160,256], index: 1, kind: input, shape index: {}]
  %s2 = inlined_call_operand.vmem [shape: f32[1,128], index: 2, kind: input, shape index: {}]
  %s3 = inlined_call_operand.vmem [shape: bf16[640,256], index: 3, kind: input, shape index: {}]
  %s4 = inlined_call_operand.vmem [shape: f32[1,128], index: 4, kind: input, shape index: {}]
  %s5 = inlined_call_operand.vmem [shape: bf16[640,128], index: 5, kind: input, shape index: {}]
  %s6 = inlined_call_operand.vmem [shape: f32[1,128], index: 6, kind: input, shape index: {}]
  %s7 = inlined_call_operand.vmem [shape: bf16[128,128], index: 7, kind: input, shape index: {}]
  %s8 = inlined_call_operand.vmem [shape: f32[1,128], index: 8, kind: input, shape index: {}]
  %s9 = inlined_call_operand.vmem [shape: bf16[128,128], index: 9, kind: input, shape index: {}]
  %s10 = inlined_call_operand.vmem [shape: f32[1,128], index: 10, kind: input, shape index: {}]
  %s11 = inlined_call_operand.vmem [shape: f32[8,128], index: 11, kind: output, shape index: {}]
  %s12 = sld [smem:[#allocation0]]
  $region54: #{net_forward.1} parent=0
    _
  %s14 = ssub.s32 1, %s12
  %s15 = scalar_select 0, %s14, %s12
  // Predicated region
  $region2: #{net_forward.1} parent=0 // pred_check
    _
  $region3: #{net_forward.1} parent=0 // pred_check_branch
    %17 = sbr.rel (0) target = $region5
  $region4: #{net_forward.1} parent=0 // pred_region
    _
  $region5: #{net_forward.1} parent=0 // pred_fallthru
    _
  // Predicated region
  $region6: #{net_forward.1} parent=0 // pred_check
    _
  $region7: #{net_forward.1} parent=0 // pred_check_branch
    %19 = sbr.rel (0) target = $region9
  $region8: #{net_forward.1} parent=0 // pred_region
    _
  $region9: #{net_forward.1} parent=0 // pred_fallthru
    _
  // Predicated region
  $region10: #{net_forward.1} parent=0 // pred_check
    _
  $region11: #{net_forward.1} parent=0 // pred_check_branch
    %21 = sbr.rel (0) target = $region13
  $region12: #{net_forward.1} parent=0 // pred_region
    _
  $region13: #{net_forward.1} parent=0 // pred_fallthru
    _
  // Predicated region
  $region14: #{net_forward.1} parent=0 // pred_check
    _
  $region15: #{net_forward.1} parent=0 // pred_check_branch
    %23 = sbr.rel (0) target = $region17
  $region16: #{net_forward.1} parent=0 // pred_region
    _
  $region17: #{net_forward.1} parent=0 // pred_fallthru
    _
  // Predicated region
  $region18: #{net_forward.1} parent=0 // pred_check
    _
  $region19: #{net_forward.1} parent=0 // pred_check_branch
    %25 = sbr.rel (0) target = $region21
  $region20: #{net_forward.1} parent=0 // pred_region
    _
  $region21: #{net_forward.1} parent=0 // pred_fallthru
    _
  // Predicated region
  $region22: #{net_forward.1} parent=0 // pred_check
    _
  $region23: #{net_forward.1} parent=0 // pred_check_branch
    %27 = sbr.rel (0) target = $region25
  $region24: #{net_forward.1} parent=0 // pred_region
    _
  $region25: #{net_forward.1} parent=0 // pred_fallthru
    _
  // Predicated region
  $region26: #{net_forward.1} parent=0 // pred_check
    _
  $region27: #{net_forward.1} parent=0 // pred_check_branch
    %29 = sbr.rel (0) target = $region29
  $region28: #{net_forward.1} parent=0 // pred_region
    _
  $region29: #{net_forward.1} parent=0 // pred_fallthru
    _
  // Predicated region
  $region30: #{net_forward.1} parent=0 // pred_check
    _
  $region31: #{net_forward.1} parent=0 // pred_check_branch
    %31 = sbr.rel (0) target = $region33
  $region32: #{net_forward.1} parent=0 // pred_region
    _
  $region33: #{net_forward.1} parent=0 // pred_fallthru
    _
  // Predicated region
  $region34: #{net_forward.1} parent=0 // pred_check
    _
  $region35: #{net_forward.1} parent=0 // pred_check_branch
    %33 = sbr.rel (0) target = $region37
  $region36: #{net_forward.1} parent=0 // pred_region
    _
  $region37: #{net_forward.1} parent=0 // pred_fallthru
    _
  // Predicated region
  $region38: #{net_forward.1} parent=0 // pred_check
    _
  $region39: #{net_forward.1} parent=0 // pred_check_branch
    %35 = sbr.rel (0) target = $region41
  $region40: #{net_forward.1} parent=0 // pred_region
    _
  $region41: #{net_forward.1} parent=0 // pred_fallthru
    _
  // Predicated region
  $region42: #{net_forward.1} parent=0 // pred_check
    _
  $region43: #{net_forward.1} parent=0 // pred_check_branch
    %37 = sbr.rel (0) target = $region45
  $region44: #{net_forward.1} parent=0 // pred_region
    _
  $region45: #{net_forward.1} parent=0 // pred_fallthru
    _
  %v39 = vld [vmem:[%s0] sm:$0xff]
  %v40 = vld [vmem:[%s0 + $0x8] sm:$0xff]
  %v41 = vld [vmem:[%s0 + $0x10] sm:$0xff]
  %v42 = vld [vmem:[%s0 + $0x18] sm:$0xff]
  %v43 = vld [vmem:[%s0 + $0x20] sm:$0xff]
  %v44 = vld [vmem:[%s0 + $0x28] sm:$0xff]
  %v45 = vld [vmem:[%s0 + $0x30] sm:$0xff]
  %v46 = vld [vmem:[%s0 + $0x38] sm:$0xff]
  %v47 = vld [vmem:[%s0 + $0x40] sm:$0xff]
  %v48 = vld [vmem:[%s0 + $0x48] sm:$0xff]
  %v49 = vld [vmem:[%s0 + $0x50] sm:$0xff]
  %v50 = vld [vmem:[%s0 + $0x58] sm:$0xff]
  %v51 = vld [vmem:[%s0 + $0x60] sm:$0xff]
  %v52 = vld [vmem:[%s0 + $0x68] sm:$0xff]
  %v53 = vld [vmem:[%s0 + $0x70] sm:$0xff]
  %v54 = vld [vmem:[%s0 + $0x78] sm:$0xff]
  %v55 = vld [vmem:[%s0 + $0x80] sm:$0xff]
  %v56 = vld [vmem:[%s0 + $0x88] sm:$0xff]
  %v57 = vld [vmem:[%s0 + $0x90] sm:$0xff]
  %v58 = vld [vmem:[%s0 + $0x98] sm:$0xff]
  %v59 = vld [vmem:[%s0 + $0xa0] sm:$0xff]
  %v60 = vld [vmem:[%s0 + $0xa8] sm:$0xff]
  %v61 = vld [vmem:[%s0 + $0xb0] sm:$0xff]
  %v62 = vld [vmem:[%s0 + $0xb8] sm:$0xff]
  %v63 = vld [vmem:[%s0 + $0xc0] sm:$0xff]
  %v64 = vld [vmem:[%s0 + $0xc8] sm:$0xff]
  %v65 = vld [vmem:[%s0 + $0xd0] sm:$0xff]
  %v66 = vld [vmem:[%s0 + $0xd8] sm:$0xff]
  %v67 = vld [vmem:[%s1] sm:$0xff]
  %v68 = vld [vmem:[%s1 + $0x8] sm:$0xff]
  %v69 = vld [vmem:[%s1 + $0x10] sm:$0xff]
  %v70 = vld [vmem:[%s1 + $0x18] sm:$0xff]
  %v71 = vld [vmem:[%s1 + $0x20] sm:$0xff]
  %v72 = vld [vmem:[%s1 + $0x28] sm:$0xff]
  %v73 = vld [vmem:[%s1 + $0x30] sm:$0xff]
  %v74 = vld [vmem:[%s1 + $0x38] sm:$0xff]
  %v75 = vld [vmem:[%s1 + $0x40] sm:$0xff]
  %v76 = vld [vmem:[%s1 + $0x48] sm:$0xff]
  %v77 = vld [vmem:[%s1 + $0x50] sm:$0xff]
  %v78 = vld [vmem:[%s1 + $0x58] sm:$0xff]
  %v79 = vld [vmem:[%s1 + $0x60] sm:$0xff]
  %v80 = vld [vmem:[%s1 + $0x68] sm:$0xff]
  %v81 = vld [vmem:[%s1 + $0x70] sm:$0xff]
  %v82 = vld [vmem:[%s1 + $0x78] sm:$0xff]
  %v83 = vld [vmem:[%s1 + $0x80] sm:$0xff]
  %v84 = vld [vmem:[%s1 + $0x88] sm:$0xff]
  %v85 = vld [vmem:[%s1 + $0x90] sm:$0xff]
  %v86 = vld [vmem:[%s1 + $0x98] sm:$0xff]
  %v115 = vunpack.c.l.b16 %v39
  %v116 = vunpack.c.h.b16 %v39
  %v117 = vunpack.c.l.b16 %v40
  %v118 = vunpack.c.h.b16 %v40
  %v119 = vunpack.c.l.b16 %v41
  %v120 = vunpack.c.h.b16 %v41
  %v121 = vunpack.c.l.b16 %v42
  %v122 = vunpack.c.h.b16 %v42
  %v123 = vunpack.c.l.b16 %v43
  %v124 = vunpack.c.h.b16 %v43
  %v125 = vunpack.c.l.b16 %v44
  %v126 = vunpack.c.h.b16 %v44
  %v127 = vunpack.c.l.b16 %v45
  %v128 = vunpack.c.h.b16 %v45
  %v129 = vunpack.c.l.b16 %v46
  %v130 = vunpack.c.h.b16 %v46
  %v131 = vunpack.c.l.b16 %v47
  %v132 = vunpack.c.h.b16 %v47
  %v133 = vunpack.c.l.b16 %v48
  %v134 = vunpack.c.h.b16 %v48
  %v135 = vunpack.c.l.b16 %v49
  %v136 = vunpack.c.h.b16 %v49
  %v137 = vunpack.c.l.b16 %v50
  %v138 = vunpack.c.h.b16 %v50
  %v139 = vunpack.c.l.b16 %v51
  %v140 = vunpack.c.h.b16 %v51
  %v141 = vunpack.c.l.b16 %v52
  %v142 = vunpack.c.h.b16 %v52
  %v143 = vunpack.c.l.b16 %v53
  %v144 = vunpack.c.h.b16 %v53
  %v145 = vunpack.c.l.b16 %v54
  %v146 = vunpack.c.h.b16 %v54
  %v147 = vunpack.c.l.b16 %v55
  %v148 = vunpack.c.h.b16 %v55
  %v149 = vunpack.c.l.b16 %v56
  %v150 = vunpack.c.h.b16 %v56
  %v151 = vunpack.c.l.b16 %v57
  %v152 = vunpack.c.h.b16 %v57
  %v153 = vunpack.c.l.b16 %v58
  %v154 = vunpack.c.h.b16 %v58
  %v155 = vunpack.c.l.b16 %v59
  %v156 = vunpack.c.h.b16 %v59
  %v157 = vunpack.c.l.b16 %v60
  %v158 = vunpack.c.h.b16 %v60
  %v159 = vunpack.c.l.b16 %v61
  %v160 = vunpack.c.h.b16 %v61
  %v161 = vunpack.c.l.b16 %v62
  %v162 = vunpack.c.h.b16 %v62
  %v163 = vunpack.c.l.b16 %v63
  %v164 = vunpack.c.h.b16 %v63
  %v165 = vunpack.c.l.b16 %v64
  %v166 = vunpack.c.h.b16 %v64
  %v167 = vunpack.c.l.b16 %v65
  %v168 = vunpack.c.h.b16 %v65
  %v169 = vunpack.c.l.b16 %v66
  %v170 = vunpack.c.h.b16 %v66
  %v171 = vpack.c.b16 %v117, %v115
  %v172 = vpack.c.b16 %v118, %v116
  %v173 = vpack.c.b16 %v121, %v119
  %v174 = vpack.c.b16 %v122, %v120
  %v175 = vpack.c.b16 %v125, %v123
  %v176 = vpack.c.b16 %v126, %v124
  %v177 = vpack.c.b16 %v129, %v127
  %v178 = vpack.c.b16 %v130, %v128
  %v179 = vpack.c.b16 %v133, %v131
  %v180 = vpack.c.b16 %v134, %v132
  %v181 = vpack.c.b16 %v137, %v135
  %v182 = vpack.c.b16 %v138, %v136
  %v183 = vpack.c.b16 %v141, %v139
  %v184 = vpack.c.b16 %v142, %v140
  %v185 = vpack.c.b16 %v145, %v143
  %v186 = vpack.c.b16 %v146, %v144
  %v187 = vpack.c.b16 %v149, %v147
  %v188 = vpack.c.b16 %v150, %v148
  %v189 = vpack.c.b16 %v153, %v151
  %v190 = vpack.c.b16 %v154, %v152
  %v191 = vpack.c.b16 %v157, %v155
  %v192 = vpack.c.b16 %v158, %v156
  %v193 = vpack.c.b16 %v161, %v159
  %v194 = vpack.c.b16 %v162, %v160
  %v195 = vpack.c.b16 %v165, %v163
  %v196 = vpack.c.b16 %v166, %v164
  %v197 = vpack.c.b16 %v169, %v167
  %v198 = vpack.c.b16 %v170, %v168
  %v233 = vunpack.c.l.b16 %v67
  %v234 = vunpack.c.h.b16 %v67
  %v235 = vunpack.c.l.b16 %v68
  %v236 = vunpack.c.h.b16 %v68
  %v237 = vunpack.c.l.b16 %v69
  %v238 = vunpack.c.h.b16 %v69
  %v239 = vunpack.c.l.b16 %v70
  %v240 = vunpack.c.h.b16 %v70
  %v241 = vunpack.c.l.b16 %v71
  %v242 = vunpack.c.h.b16 %v71
  %v243 = vunpack.c.l.b16 %v72
  %v244 = vunpack.c.h.b16 %v72
  %v245 = vunpack.c.l.b16 %v73
  %v246 = vunpack.c.h.b16 %v73
  %v247 = vunpack.c.l.b16 %v74
  %v248 = vunpack.c.h.b16 %v74
  %v249 = vunpack.c.l.b16 %v75
  %v250 = vunpack.c.h.b16 %v75
  %v251 = vunpack.c.l.b16 %v76
  %v252 = vunpack.c.h.b16 %v76
  %v253 = vunpack.c.l.b16 %v77
  %v254 = vunpack.c.h.b16 %v77
  %v255 = vunpack.c.l.b16 %v78
  %v256 = vunpack.c.h.b16 %v78
  %v257 = vunpack.c.l.b16 %v79
  %v258 = vunpack.c.h.b16 %v79
  %v259 = vunpack.c.l.b16 %v80
  %v260 = vunpack.c.h.b16 %v80
  %v261 = vunpack.c.l.b16 %v81
  %v262 = vunpack.c.h.b16 %v81
  %v263 = vunpack.c.l.b16 %v82
  %v264 = vunpack.c.h.b16 %v82
  %v265 = vunpack.c.l.b16 %v83
  %v266 = vunpack.c.h.b16 %v83
  %v267 = vunpack.c.l.b16 %v84
  %v268 = vunpack.c.h.b16 %v84
  %v269 = vunpack.c.l.b16 %v85
  %v270 = vunpack.c.h.b16 %v85
  %v271 = vunpack.c.l.b16 %v86
  %v272 = vunpack.c.h.b16 %v86
  %v273 = vpack.c.b16 %v235, %v233
  %v274 = vpack.c.b16 %v236, %v234
  %v275 = vpack.c.b16 %v239, %v237
  %v276 = vpack.c.b16 %v240, %v238
  %v277 = vpack.c.b16 %v243, %v241
  %v278 = vpack.c.b16 %v244, %v242
  %v279 = vpack.c.b16 %v247, %v245
  %v280 = vpack.c.b16 %v248, %v246
  %v281 = vpack.c.b16 %v251, %v249
  %v282 = vpack.c.b16 %v252, %v250
  %v283 = vpack.c.b16 %v255, %v253
  %v284 = vpack.c.b16 %v256, %v254
  %v285 = vpack.c.b16 %v259, %v257
  %v286 = vpack.c.b16 %v260, %v258
  %v287 = vpack.c.b16 %v263, %v261
  %v288 = vpack.c.b16 %v264, %v262
  %v289 = vpack.c.b16 %v267, %v265
  %v290 = vpack.c.b16 %v268, %v266
  %v291 = vpack.c.b16 %v271, %v269
  %v292 = vpack.c.b16 %v272, %v270
  %vm313 = vcmask 261120
  %v315 = vsel %vm313, %v172, 0
  %v318 = vsel %vm313, %v174, 0
  %v321 = vsel %vm313, %v176, 0
  %v324 = vsel %vm313, %v178, 0
  %v327 = vsel %vm313, %v180, 0
  %v330 = vsel %vm313, %v182, 0
  %v333 = vsel %vm313, %v184, 0
  %v336 = vsel %vm313, %v186, 0
  %v339 = vsel %vm313, %v188, 0
  %v342 = vsel %vm313, %v190, 0
  %v345 = vsel %vm313, %v192, 0
  %v348 = vsel %vm313, %v194, 0
  %v351 = vsel %vm313, %v196, 0
  %v354 = vsel %vm313, %v198, 0
  %356 = vmatprep.subr.bf16.mxu0 %v274
  %357 = vmatpush1.bf16.msra.mxu0 %v273
  %358 = vmatprep.subr.bf16.mxu0 %v276
  %359 = vmatpush1.bf16.msra.mxu0 %v275
  %360 = vmatprep.subr.bf16.mxu0 %v278
  %361 = vmatpush1.bf16.msra.mxu0 %v277
  %362 = vmatprep.subr.bf16.mxu0 %v280
  %363 = vmatpush1.bf16.msra.mxu0 %v279
  %364 = vmatprep.subr.bf16.mxu0 %v282
  %365 = vmatpush1.bf16.msra.mxu0 %v281
  %366 = vmatprep.subr.bf16.mxu0 %v284
  %367 = vmatpush1.bf16.msra.mxu0 %v283
  %368 = vmatprep.subr.bf16.mxu0 %v286
  %369 = vmatpush1.bf16.msra.mxu0 %v285
  %370 = vmatprep.subr.bf16.mxu0 %v288
  %371 = vmatpush1.bf16.msra.mxu0 %v287
  %372 = vmatprep.subr.bf16.mxu0 %v290
  %373 = vmatpush1.bf16.msra.mxu0 %v289
  %374 = vmatprep.subr.bf16.mxu0 %v292
  %375 = vmatpush1.bf16.msra.mxu0 %v291
  %376 = vmatprep.subr.bf16.mxu0 0
  %377 = vmatpush1.bf16.msra.mxu0 0
  %378 = vmatprep.subr.bf16.mxu0 0
  %379 = vmatpush1.bf16.msra.mxu0 0
  %380 = vmatprep.subr.bf16.mxu0 0
  %381 = vmatpush1.bf16.msra.mxu0 0
  %382 = vmatprep.subr.bf16.mxu0 0
  %383 = vmatpush1.bf16.msra.mxu0 0
  %384 = vmatprep.subr.bf16.mxu0 0
  %385 = vmatpush1.bf16.msra.mxu0 0
  %386 = vmatprep.subr.bf16.mxu0 0
  %387 = vmatpush1.bf16.msra.mxu0 0
  %388 = vmatprep.mubr.bf16.mxu0 %v315
  %389 = vmatmul.mubr.bf16.gmra.mrb[0].mxu0 %v171
  %v390 = vpop.f32.mrb[0].mxu0
  %v391 = vadd.f32 0.0, %v390
  %v392 = vpop.f32.mrb[0].mxu0
  %v393 = vadd.f32 0.0, %v392
  %v394 = vpop.f32.mrb[0].mxu0
  %v395 = vadd.f32 0.0, %v394
  %v396 = vpop.f32.mrb[0].mxu0
  %v397 = vadd.f32 0.0, %v396
  %398 = vmatprep.mubr.bf16.mxu0 %v318
  %399 = vmatmul.mubr.bf16.gmra.mrb[0].mxu0 %v173
  %v400 = vpop.f32.mrb[0].mxu0
  %v401 = vadd.f32 0.0, %v400
  %v402 = vpop.f32.mrb[0].mxu0
  %v403 = vadd.f32 0.0, %v402
  %v404 = vpop.f32.mrb[0].mxu0
  %v405 = vadd.f32 0.0, %v404
  %v406 = vpop.f32.mrb[0].mxu0
  %v407 = vadd.f32 0.0, %v406
  %408 = vmatprep.mubr.bf16.mxu0 %v321
  %409 = vmatmul.mubr.bf16.gmra.mrb[0].mxu0 %v175
  %v410 = vpop.f32.mrb[0].mxu0
  %v411 = vadd.f32 0.0, %v410
  %v412 = vpop.f32.mrb[0].mxu0
  %v413 = vadd.f32 0.0, %v412
  %v414 = vpop.f32.mrb[0].mxu0
  %v415 = vadd.f32 0.0, %v414
  %v416 = vpop.f32.mrb[0].mxu0
  %v417 = vadd.f32 0.0, %v416
  %418 = vmatprep.mubr.bf16.mxu0 %v324
  %419 = vmatmul.mubr.bf16.gmra.mrb[0].mxu0 %v177
  %v420 = vpop.f32.mrb[0].mxu0
  %v421 = vadd.f32 0.0, %v420
  %v422 = vpop.f32.mrb[0].mxu0
  %v423 = vadd.f32 0.0, %v422
  %v424 = vpop.f32.mrb[0].mxu0
  %v425 = vadd.f32 0.0, %v424
  %v426 = vpop.f32.mrb[0].mxu0
  %v427 = vadd.f32 0.0, %v426
  %428 = vmatprep.mubr.bf16.mxu0 %v327
  %429 = vmatmul.mubr.bf16.gmra.mrb[0].mxu0 %v179
  %v430 = vpop.f32.mrb[0].mxu0
  %v431 = vadd.f32 0.0, %v430
  %v432 = vpop.f32.mrb[0].mxu0
  %v433 = vadd.f32 0.0, %v432
  %v434 = vpop.f32.mrb[0].mxu0
  %v435 = vadd.f32 0.0, %v434
  %v436 = vpop.f32.mrb[0].mxu0
  %v437 = vadd.f32 0.0, %v436
  %438 = vmatprep.mubr.bf16.mxu0 %v330
  %439 = vmatmul.mubr.bf16.gmra.mrb[0].mxu0 %v181
  %v440 = vpop.f32.mrb[0].mxu0
  %v441 = vadd.f32 0.0, %v440
  %v442 = vpop.f32.mrb[0].mxu0
  %v443 = vadd.f32 0.0, %v442
  %v444 = vpop.f32.mrb[0].mxu0
  %v445 = vadd.f32 0.0, %v444
  %v446 = vpop.f32.mrb[0].mxu0
  %v447 = vadd.f32 0.0, %v446
  %448 = vmatprep.mubr.bf16.mxu0 %v333
  %449 = vmatmul.mubr.bf16.gmra.mrb[0].mxu0 %v183
  %v450 = vpop.f32.mrb[0].mxu0
  %v451 = vadd.f32 0.0, %v450
  %v452 = vpop.f32.mrb[0].mxu0
  %v453 = vadd.f32 0.0, %v452
  %v454 = vpop.f32.mrb[0].mxu0
  %v455 = vadd.f32 0.0, %v454
  %v456 = vpop.f32.mrb[0].mxu0
  %v457 = vadd.f32 0.0, %v456
  %458 = vmatprep.mubr.bf16.mxu0 %v336
  %459 = vmatmul.mubr.bf16.gmra.mrb[0].mxu0 %v185
  %v460 = vpop.f32.mrb[0].mxu0
  %v461 = vadd.f32 0.0, %v460
  %v462 = vpop.f32.mrb[0].mxu0
  %v463 = vadd.f32 0.0, %v462
  %v464 = vpop.f32.mrb[0].mxu0
  %v465 = vadd.f32 0.0, %v464
  %v466 = vpop.f32.mrb[0].mxu0
  %v467 = vadd.f32 0.0, %v466
  %468 = vmatprep.mubr.bf16.mxu0 %v339
  %469 = vmatmul.mubr.bf16.gmra.mrb[0].mxu0 %v187
  %v470 = vpop.f32.mrb[0].mxu0
  %v471 = vadd.f32 0.0, %v470
  %v472 = vpop.f32.mrb[0].mxu0
  %v473 = vadd.f32 0.0, %v472
  %v474 = vpop.f32.mrb[0].mxu0
  %v475 = vadd.f32 0.0, %v474
  %v476 = vpop.f32.mrb[0].mxu0
  %v477 = vadd.f32 0.0, %v476
  %478 = vmatprep.mubr.bf16.mxu0 %v342
  %479 = vmatmul.mubr.bf16.gmra.mrb[0].mxu0 %v189
  %v480 = vpop.f32.mrb[0].mxu0
  %v481 = vadd.f32 0.0, %v480
  %v482 = vpop.f32.mrb[0].mxu0
  %v483 = vadd.f32 0.0, %v482
  %v484 = vpop.f32.mrb[0].mxu0
  %v485 = vadd.f32 0.0, %v484
  %v486 = vpop.f32.mrb[0].mxu0
  %v487 = vadd.f32 0.0, %v486
  %488 = vmatprep.mubr.bf16.mxu0 %v345
  %489 = vmatmul.mubr.bf16.gmra.mrb[0].mxu0 %v191
  %v490 = vpop.f32.mrb[0].mxu0
  %v491 = vadd.f32 0.0, %v490
  %v492 = vpop.f32.mrb[0].mxu0
  %v493 = vadd.f32 0.0, %v492
  %v494 = vpop.f32.mrb[0].mxu0
  %v495 = vadd.f32 0.0, %v494
  %v496 = vpop.f32.mrb[0].mxu0
  %v497 = vadd.f32 0.0, %v496
  %498 = vmatprep.mubr.bf16.mxu0 %v348
  %499 = vmatmul.mubr.bf16.gmra.mrb[0].mxu0 %v193
  %v500 = vpop.f32.mrb[0].mxu0
  %v501 = vadd.f32 0.0, %v500
  %v502 = vpop.f32.mrb[0].mxu0
  %v503 = vadd.f32 0.0, %v502
  %v504 = vpop.f32.mrb[0].mxu0
  %v505 = vadd.f32 0.0, %v504
  %v506 = vpop.f32.mrb[0].mxu0
  %v507 = vadd.f32 0.0, %v506
  %508 = vmatprep.mubr.bf16.mxu0 %v351
  %509 = vmatmul.mubr.bf16.gmra.mrb[0].mxu0 %v195
  %v510 = vpop.f32.mrb[0].mxu0
  %v511 = vadd.f32 0.0, %v510
  %v512 = vpop.f32.mrb[0].mxu0
  %v513 = vadd.f32 0.0, %v512
  %v514 = vpop.f32.mrb[0].mxu0
  %v515 = vadd.f32 0.0, %v514
  %v516 = vpop.f32.mrb[0].mxu0
  %v517 = vadd.f32 0.0, %v516
  %518 = vmatprep.mubr.bf16.mxu0 %v354
  %519 = vmatmul.mubr.bf16.gmra.mrb[0].mxu0 %v197
  %v520 = vpop.f32.mrb[0].mxu0
  %v521 = vadd.f32 0.0, %v520
  %v522 = vpop.f32.mrb[0].mxu0
  %v523 = vadd.f32 0.0, %v522
  %v524 = vpop.f32.mrb[0].mxu0
  %v525 = vadd.f32 0.0, %v524
  %v526 = vpop.f32.mrb[0].mxu0
  %v527 = vadd.f32 0.0, %v526
  %528 = vdwg.mxu0
  %v529 = vmax.f32 %v391, %v393
  %v530 = vmax.f32 %v395, %v397
  %v531 = vmax.f32 %v401, %v403
  %v532 = vmax.f32 %v405, %v407
  %v533 = vmax.f32 %v411, %v413
  %v534 = vmax.f32 %v415, %v417
  %v535 = vmax.f32 %v421, %v423
  %v536 = vmax.f32 %v425, %v427
  %v537 = vmax.f32 %v431, %v433
  %v538 = vmax.f32 %v435, %v437
  %v539 = vmax.f32 %v441, %v443
  %v540 = vmax.f32 %v445, %v447
  %v541 = vmax.f32 %v451, %v453
  %v542 = vmax.f32 %v455, %v457
  %v543 = vmax.f32 %v461, %v463
  %v544 = vmax.f32 %v465, %v467
  %v545 = vmax.f32 %v471, %v473
  %v546 = vmax.f32 %v475, %v477
  %v547 = vmax.f32 %v481, %v483
  %v548 = vmax.f32 %v485, %v487
  %v549 = vmax.f32 %v491, %v493
  %v550 = vmax.f32 %v495, %v497
  %v551 = vmax.f32 %v501, %v503
  %v552 = vmax.f32 %v505, %v507
  %v553 = vmax.f32 %v511, %v513
  %v554 = vmax.f32 %v515, %v517
  %v555 = vmax.f32 %v521, %v523
  %v556 = vmax.f32 %v525, %v527
  %v557 = vmax.f32 %v529, %v536
  %v558 = vmax.f32 %v530, %v537
  %v559 = vmax.f32 %v531, %v538
  %v560 = vmax.f32 %v532, %v539
  %v561 = vmax.f32 %v533, %v540
  %v562 = vmax.f32 %v534, %v541
  %v563 = vmax.f32 %v535, %v542
  %v564 = vmax.f32 %v543, %v550
  %v565 = vmax.f32 %v544, %v551
  %v566 = vmax.f32 %v545, %v552
  %v567 = vmax.f32 %v546, %v553
  %v568 = vmax.f32 %v547, %v554
  %v569 = vmax.f32 %v548, %v555
  %v570 = vmax.f32 %v549, %v556
  %v571 = vld [vmem:[%s2] sm:$0x1]
  %v573 = vlaneseq
  %v574 = vshrl.u32 %v573, 7
  %v575 = vsub.s32 0, %v574
  %v576 = vrot.slane %v571, %v575
  %v578 = vadd.f32 %v557, %v576
  %v579 = vadd.f32 %v558, %v576
  %v580 = vadd.f32 %v559, %v576
  %v581 = vadd.f32 %v560, %v576
  %v582 = vadd.f32 %v561, %v576
  %v583 = vadd.f32 %v562, %v576
  %v584 = vadd.f32 %v563, %v576
  %v585 = vadd.f32 %v564, %v576
  %v586 = vadd.f32 %v565, %v576
  %v587 = vadd.f32 %v566, %v576
  %v588 = vadd.f32 %v567, %v576
  %v589 = vadd.f32 %v568, %v576
  %v590 = vadd.f32 %v569, %v576
  %v591 = vadd.f32 %v570, %v576
  %v592 = vmax.f32 %v578, 0.0
  %v593 = vmax.f32 %v579, 0.0
  %v594 = vmax.f32 %v580, 0.0
  %v595 = vmax.f32 %v581, 0.0
  %v596 = vmax.f32 %v582, 0.0
  %v597 = vmax.f32 %v583, 0.0
  %v598 = vmax.f32 %v584, 0.0
  %v599 = vmax.f32 %v585, 0.0
  %v600 = vmax.f32 %v586, 0.0
  %v601 = vmax.f32 %v587, 0.0
  %v602 = vmax.f32 %v588, 0.0
  %v603 = vmax.f32 %v589, 0.0
  %v604 = vmax.f32 %v590, 0.0
  %v605 = vmax.f32 %v591, 0.0
  %v606 = vpack.c.bf16 %v593, %v592
  %v607 = vpack.c.bf16 %v595, %v594
  %v608 = vpack.c.bf16 %v597, %v596
  %v609 = vpack.c.bf16 %v599, %v598
  %v610 = vpack.c.bf16 %v601, %v600
  %v611 = vpack.c.bf16 %v603, %v602
  %v612 = vpack.c.bf16 %v605, %v604
  %vm616 = vcmask 1043456
  %v617 = vrot.slane %v609, 4
  %v618 = vrot.slane %v610, 4
  %v619 = vsel %vm616, %v617, %v618
  %v620 = vrot.slane %v611, 4
  %v621 = vsel %vm616, %v618, %v620
  %v627 = vrot.slane %v606, 4
  %v628 = vrot.slane %v607, 4
  %v629 = vsel %vm616, %v627, %v628
  %v630 = vrot.slane %v608, 4
  %v631 = vsel %vm616, %v628, %v630
  %v635 = vrot.slane %v612, 4
  %v636 = vsel %vm616, %v620, %v635
  %v638 = vsel %vm616, %v630, %v617
  %vm640 = vcmask 1043456
  %v643 = vsel %vm640, %v608, %v609
  %v647 = vsel %vm640, %v620, %v606
  %v651 = vsel %vm640, %v630, %v618
  %v655 = vsel %vm640, %v612, %v628
  %v658 = vsel %vm640, %v609, %v610
  %v660 = vld [vmem:[%s3] sm:$0xff]
  %v661 = vld [vmem:[%s3 + $0x8] sm:$0xff]
  %v662 = vld [vmem:[%s3 + $0x10] sm:$0xff]
  %v663 = vld [vmem:[%s3 + $0x18] sm:$0xff]
  %v664 = vld [vmem:[%s3 + $0x20] sm:$0xff]
  %v665 = vld [vmem:[%s3 + $0x28] sm:$0xff]
  %v666 = vld [vmem:[%s3 + $0x30] sm:$0xff]
  %v667 = vld [vmem:[%s3 + $0x38] sm:$0xff]
  %v668 = vld [vmem:[%s3 + $0x40] sm:$0xff]
  %v669 = vld [vmem:[%s3 + $0x48] sm:$0xff]
  %v670 = vld [vmem:[%s3 + $0x50] sm:$0xff]
  %v671 = vld [vmem:[%s3 + $0x58] sm:$0xff]
  %v672 = vld [vmem:[%s3 + $0x60] sm:$0xff]
  %v673 = vld [vmem:[%s3 + $0x68] sm:$0xff]
  %v674 = vld [vmem:[%s3 + $0x70] sm:$0xff]
  %v675 = vld [vmem:[%s3 + $0x78] sm:$0xff]
  %v676 = vld [vmem:[%s3 + $0x80] sm:$0xff]
  %v677 = vld [vmem:[%s3 + $0x88] sm:$0xff]
  %v678 = vld [vmem:[%s3 + $0x90] sm:$0xff]
  %v679 = vld [vmem:[%s3 + $0x98] sm:$0xff]
  %v680 = vld [vmem:[%s3 + $0xa0] sm:$0xff]
  %v681 = vld [vmem:[%s3 + $0xa8] sm:$0xff]
  %v682 = vld [vmem:[%s3 + $0xb0] sm:$0xff]
  %v683 = vld [vmem:[%s3 + $0xb8] sm:$0xff]
  %v684 = vld [vmem:[%s3 + $0xc0] sm:$0xff]
  %v685 = vld [vmem:[%s3 + $0xc8] sm:$0xff]
  %v686 = vld [vmem:[%s3 + $0xd0] sm:$0xff]
  %v687 = vld [vmem:[%s3 + $0xd8] sm:$0xff]
  %v688 = vld [vmem:[%s3 + $0xe0] sm:$0xff]
  %v689 = vld [vmem:[%s3 + $0xe8] sm:$0xff]
  %v690 = vld [vmem:[%s3 + $0xf0] sm:$0xff]
  %v691 = vld [vmem:[%s3 + $0xf8] sm:$0xff]
  %v692 = vld [vmem:[%s3 + $0x100] sm:$0xff]
  %v693 = vld [vmem:[%s3 + $0x108] sm:$0xff]
  %v694 = vld [vmem:[%s3 + $0x110] sm:$0xff]
  %v695 = vld [vmem:[%s3 + $0x118] sm:$0xff]
  %v696 = vld [vmem:[%s3 + $0x120] sm:$0xff]
  %v697 = vld [vmem:[%s3 + $0x128] sm:$0xff]
  %v698 = vld [vmem:[%s3 + $0x130] sm:$0xff]
  %v699 = vld [vmem:[%s3 + $0x138] sm:$0xff]
  %v700 = vld [vmem:[%s3 + $0x140] sm:$0xff]
  %v701 = vld [vmem:[%s3 + $0x148] sm:$0xff]
  %v702 = vld [vmem:[%s3 + $0x150] sm:$0xff]
  %v703 = vld [vmem:[%s3 + $0x158] sm:$0xff]
  %v704 = vld [vmem:[%s3 + $0x160] sm:$0xff]
  %v705 = vld [vmem:[%s3 + $0x168] sm:$0xff]
  %v706 = vld [vmem:[%s3 + $0x170] sm:$0xff]
  %v707 = vld [vmem:[%s3 + $0x178] sm:$0xff]
  %v708 = vld [vmem:[%s3 + $0x180] sm:$0xff]
  %v709 = vld [vmem:[%s3 + $0x188] sm:$0xff]
  %v710 = vld [vmem:[%s3 + $0x190] sm:$0xff]
  %v711 = vld [vmem:[%s3 + $0x198] sm:$0xff]
  %v712 = vld [vmem:[%s3 + $0x1a0] sm:$0xff]
  %v713 = vld [vmem:[%s3 + $0x1a8] sm:$0xff]
  %v714 = vld [vmem:[%s3 + $0x1b0] sm:$0xff]
  %v715 = vld [vmem:[%s3 + $0x1b8] sm:$0xff]
  %v716 = vld [vmem:[%s3 + $0x1c0] sm:$0xff]
  %v717 = vld [vmem:[%s3 + $0x1c8] sm:$0xff]
  %v718 = vld [vmem:[%s3 + $0x1d0] sm:$0xff]
  %v719 = vld [vmem:[%s3 + $0x1d8] sm:$0xff]
  %v720 = vld [vmem:[%s3 + $0x1e0] sm:$0xff]
  %v721 = vld [vmem:[%s3 + $0x1e8] sm:$0xff]
  %v722 = vld [vmem:[%s3 + $0x1f0] sm:$0xff]
  %v723 = vld [vmem:[%s3 + $0x1f8] sm:$0xff]
  %v724 = vld [vmem:[%s3 + $0x200] sm:$0xff]
  %v725 = vld [vmem:[%s3 + $0x208] sm:$0xff]
  %v726 = vld [vmem:[%s3 + $0x210] sm:$0xff]
  %v727 = vld [vmem:[%s3 + $0x218] sm:$0xff]
  %v728 = vld [vmem:[%s3 + $0x220] sm:$0xff]
  %v729 = vld [vmem:[%s3 + $0x228] sm:$0xff]
  %v730 = vld [vmem:[%s3 + $0x230] sm:$0xff]
  %v731 = vld [vmem:[%s3 + $0x238] sm:$0xff]
  %v732 = vld [vmem:[%s3 + $0x240] sm:$0xff]
  %v733 = vld [vmem:[%s3 + $0x248] sm:$0xff]
  %v734 = vld [vmem:[%s3 + $0x250] sm:$0xff]
  %v735 = vld [vmem:[%s3 + $0x258] sm:$0xff]
  %v736 = vld [vmem:[%s3 + $0x260] sm:$0xff]
  %v737 = vld [vmem:[%s3 + $0x268] sm:$0xff]
  %v738 = vld [vmem:[%s3 + $0x270] sm:$0xff]
  %v739 = vld [vmem:[%s3 + $0x278] sm:$0xff]
  %v820 = vunpack.c.l.b16 %v660
  %v821 = vunpack.c.h.b16 %v660
  %v822 = vunpack.c.l.b16 %v661
  %v823 = vunpack.c.h.b16 %v661
  %v824 = vunpack.c.l.b16 %v662
  %v825 = vunpack.c.h.b16 %v662
  %v826 = vunpack.c.l.b16 %v663
  %v827 = vunpack.c.h.b16 %v663
  %v828 = vunpack.c.l.b16 %v664
  %v829 = vunpack.c.h.b16 %v664
  %v830 = vunpack.c.l.b16 %v665
  %v831 = vunpack.c.h.b16 %v665
  %v832 = vunpack.c.l.b16 %v666
  %v833 = vunpack.c.h.b16 %v666
  %v834 = vunpack.c.l.b16 %v667
  %v835 = vunpack.c.h.b16 %v667
  %v836 = vunpack.c.l.b16 %v668
  %v837 = vunpack.c.h.b16 %v668
  %v838 = vunpack.c.l.b16 %v669
  %v839 = vunpack.c.h.b16 %v669
  %v840 = vunpack.c.l.b16 %v670
  %v841 = vunpack.c.h.b16 %v670
  %v842 = vunpack.c.l.b16 %v671
  %v843 = vunpack.c.h.b16 %v671
  %v844 = vunpack.c.l.b16 %v672
  %v845 = vunpack.c.h.b16 %v672
  %v846 = vunpack.c.l.b16 %v673
  %v847 = vunpack.c.h.b16 %v673
  %v848 = vunpack.c.l.b16 %v674
  %v849 = vunpack.c.h.b16 %v674
  %v850 = vunpack.c.l.b16 %v675
  %v851 = vunpack.c.h.b16 %v675
  %v852 = vunpack.c.l.b16 %v676
  %v853 = vunpack.c.h.b16 %v676
  %v854 = vunpack.c.l.b16 %v677
  %v855 = vunpack.c.h.b16 %v677
  %v856 = vunpack.c.l.b16 %v678
  %v857 = vunpack.c.h.b16 %v678
  %v858 = vunpack.c.l.b16 %v679
  %v859 = vunpack.c.h.b16 %v679
  %v860 = vunpack.c.l.b16 %v680
  %v861 = vunpack.c.h.b16 %v680
  %v862 = vunpack.c.l.b16 %v681
  %v863 = vunpack.c.h.b16 %v681
  %v864 = vunpack.c.l.b16 %v682
  %v865 = vunpack.c.h.b16 %v682
  %v866 = vunpack.c.l.b16 %v683
  %v867 = vunpack.c.h.b16 %v683
  %v868 = vunpack.c.l.b16 %v684
  %v869 = vunpack.c.h.b16 %v684
  %v870 = vunpack.c.l.b16 %v685
  %v871 = vunpack.c.h.b16 %v685
  %v872 = vunpack.c.l.b16 %v686
  %v873 = vunpack.c.h.b16 %v686
  %v874 = vunpack.c.l.b16 %v687
  %v875 = vunpack.c.h.b16 %v687
  %v876 = vunpack.c.l.b16 %v688
  %v877 = vunpack.c.h.b16 %v688
  %v878 = vunpack.c.l.b16 %v689
  %v879 = vunpack.c.h.b16 %v689
  %v880 = vunpack.c.l.b16 %v690
  %v881 = vunpack.c.h.b16 %v690
  %v882 = vunpack.c.l.b16 %v691
  %v883 = vunpack.c.h.b16 %v691
  %v884 = vunpack.c.l.b16 %v692
  %v885 = vunpack.c.h.b16 %v692
  %v886 = vunpack.c.l.b16 %v693
  %v887 = vunpack.c.h.b16 %v693
  %v888 = vunpack.c.l.b16 %v694
  %v889 = vunpack.c.h.b16 %v694
  %v890 = vunpack.c.l.b16 %v695
  %v891 = vunpack.c.h.b16 %v695
  %v892 = vunpack.c.l.b16 %v696
  %v893 = vunpack.c.h.b16 %v696
  %v894 = vunpack.c.l.b16 %v697
  %v895 = vunpack.c.h.b16 %v697
  %v896 = vunpack.c.l.b16 %v698
  %v897 = vunpack.c.h.b16 %v698
  %v898 = vunpack.c.l.b16 %v699
  %v899 = vunpack.c.h.b16 %v699
  %v900 = vunpack.c.l.b16 %v700
  %v901 = vunpack.c.h.b16 %v700
  %v902 = vunpack.c.l.b16 %v701
  %v903 = vunpack.c.h.b16 %v701
  %v904 = vunpack.c.l.b16 %v702
  %v905 = vunpack.c.h.b16 %v702
  %v906 = vunpack.c.l.b16 %v703
  %v907 = vunpack.c.h.b16 %v703
  %v908 = vunpack.c.l.b16 %v704
  %v909 = vunpack.c.h.b16 %v704
  %v910 = vunpack.c.l.b16 %v705
  %v911 = vunpack.c.h.b16 %v705
  %v912 = vunpack.c.l.b16 %v706
  %v913 = vunpack.c.h.b16 %v706
  %v914 = vunpack.c.l.b16 %v707
  %v915 = vunpack.c.h.b16 %v707
  %v916 = vunpack.c.l.b16 %v708
  %v917 = vunpack.c.h.b16 %v708
  %v918 = vunpack.c.l.b16 %v709
  %v919 = vunpack.c.h.b16 %v709
  %v920 = vunpack.c.l.b16 %v710
  %v921 = vunpack.c.h.b16 %v710
  %v922 = vunpack.c.l.b16 %v711
  %v923 = vunpack.c.h.b16 %v711
  %v924 = vunpack.c.l.b16 %v712
  %v925 = vunpack.c.h.b16 %v712
  %v926 = vunpack.c.l.b16 %v713
  %v927 = vunpack.c.h.b16 %v713
  %v928 = vunpack.c.l.b16 %v714
  %v929 = vunpack.c.h.b16 %v714
  %v930 = vunpack.c.l.b16 %v715
  %v931 = vunpack.c.h.b16 %v715
  %v932 = vunpack.c.l.b16 %v716
  %v933 = vunpack.c.h.b16 %v716
  %v934 = vunpack.c.l.b16 %v717
  %v935 = vunpack.c.h.b16 %v717
  %v936 = vunpack.c.l.b16 %v718
  %v937 = vunpack.c.h.b16 %v718
  %v938 = vunpack.c.l.b16 %v719
  %v939 = vunpack.c.h.b16 %v719
  %v940 = vunpack.c.l.b16 %v720
  %v941 = vunpack.c.h.b16 %v720
  %v942 = vunpack.c.l.b16 %v721
  %v943 = vunpack.c.h.b16 %v721
  %v944 = vunpack.c.l.b16 %v722
  %v945 = vunpack.c.h.b16 %v722
  %v946 = vunpack.c.l.b16 %v723
  %v947 = vunpack.c.h.b16 %v723
  %v948 = vunpack.c.l.b16 %v724
  %v949 = vunpack.c.h.b16 %v724
  %v950 = vunpack.c.l.b16 %v725
  %v951 = vunpack.c.h.b16 %v725
  %v952 = vunpack.c.l.b16 %v726
  %v953 = vunpack.c.h.b16 %v726
  %v954 = vunpack.c.l.b16 %v727
  %v955 = vunpack.c.h.b16 %v727
  %v956 = vunpack.c.l.b16 %v728
  %v957 = vunpack.c.h.b16 %v728
  %v958 = vunpack.c.l.b16 %v729
  %v959 = vunpack.c.h.b16 %v729
  %v960 = vunpack.c.l.b16 %v730
  %v961 = vunpack.c.h.b16 %v730
  %v962 = vunpack.c.l.b16 %v731
  %v963 = vunpack.c.h.b16 %v731
  %v964 = vunpack.c.l.b16 %v732
  %v965 = vunpack.c.h.b16 %v732
  %v966 = vunpack.c.l.b16 %v733
  %v967 = vunpack.c.h.b16 %v733
  %v968 = vunpack.c.l.b16 %v734
  %v969 = vunpack.c.h.b16 %v734
  %v970 = vunpack.c.l.b16 %v735
  %v971 = vunpack.c.h.b16 %v735
  %v972 = vunpack.c.l.b16 %v736
  %v973 = vunpack.c.h.b16 %v736
  %v974 = vunpack.c.l.b16 %v737
  %v975 = vunpack.c.h.b16 %v737
  %v976 = vunpack.c.l.b16 %v738
  %v977 = vunpack.c.h.b16 %v738
  %v978 = vunpack.c.l.b16 %v739
  %v979 = vunpack.c.h.b16 %v739
  %v980 = vpack.c.b16 %v822, %v820
  %v981 = vpack.c.b16 %v823, %v821
  %v982 = vpack.c.b16 %v826, %v824
  %v983 = vpack.c.b16 %v827, %v825
  %v984 = vpack.c.b16 %v830, %v828
  %v985 = vpack.c.b16 %v831, %v829
  %v986 = vpack.c.b16 %v834, %v832
  %v987 = vpack.c.b16 %v835, %v833
  %v988 = vpack.c.b16 %v838, %v836
  %v989 = vpack.c.b16 %v839, %v837
  %v990 = vpack.c.b16 %v842, %v840
  %v991 = vpack.c.b16 %v843, %v841
  %v992 = vpack.c.b16 %v846, %v844
  %v993 = vpack.c.b16 %v847, %v845
  %v994 = vpack.c.b16 %v850, %v848
  %v995 = vpack.c.b16 %v851, %v849
  %v996 = vpack.c.b16 %v854, %v852
  %v997 = vpack.c.b16 %v855, %v853
  %v998 = vpack.c.b16 %v858, %v856
  %v999 = vpack.c.b16 %v859, %v857
  %v1000 = vpack.c.b16 %v862, %v860
  %v1001 = vpack.c.b16 %v863, %v861
  %v1002 = vpack.c.b16 %v866, %v864
  %v1003 = vpack.c.b16 %v867, %v865
  %v1004 = vpack.c.b16 %v870, %v868
  %v1005 = vpack.c.b16 %v871, %v869
  %v1006 = vpack.c.b16 %v874, %v872
  %v1007 = vpack.c.b16 %v875, %v873
  %v1008 = vpack.c.b16 %v878, %v876
  %v1009 = vpack.c.b16 %v879, %v877
  %v1010 = vpack.c.b16 %v882, %v880
  %v1011 = vpack.c.b16 %v883, %v881
  %v1012 = vpack.c.b16 %v886, %v884
  %v1013 = vpack.c.b16 %v887, %v885
  %v1014 = vpack.c.b16 %v890, %v888
  %v1015 = vpack.c.b16 %v891, %v889
  %v1016 = vpack.c.b16 %v894, %v892
  %v1017 = vpack.c.b16 %v895, %v893
  %v1018 = vpack.c.b16 %v898, %v896
  %v1019 = vpack.c.b16 %v899, %v897
  %v1020 = vpack.c.b16 %v902, %v900
  %v1021 = vpack.c.b16 %v903, %v901
  %v1022 = vpack.c.b16 %v906, %v904
  %v1023 = vpack.c.b16 %v907, %v905
  %v1024 = vpack.c.b16 %v910, %v908
  %v1025 = vpack.c.b16 %v911, %v909
  %v1026 = vpack.c.b16 %v914, %v912
  %v1027 = vpack.c.b16 %v915, %v913
  %v1028 = vpack.c.b16 %v918, %v916
  %v1029 = vpack.c.b16 %v919, %v917
  %v1030 = vpack.c.b16 %v922, %v920
  %v1031 = vpack.c.b16 %v923, %v921
  %v1032 = vpack.c.b16 %v926, %v924
  %v1033 = vpack.c.b16 %v927, %v925
  %v1034 = vpack.c.b16 %v930, %v928
  %v1035 = vpack.c.b16 %v931, %v929
  %v1036 = vpack.c.b16 %v934, %v932
  %v1037 = vpack.c.b16 %v935, %v933
  %v1038 = vpack.c.b16 %v938, %v936
  %v1039 = vpack.c.b16 %v939, %v937
  %v1040 = vpack.c.b16 %v942, %v940
  %v1041 = vpack.c.b16 %v943, %v941
  %v1042 = vpack.c.b16 %v946, %v944
  %v1043 = vpack.c.b16 %v947, %v945
  %v1044 = vpack.c.b16 %v950, %v948
  %v1045 = vpack.c.b16 %v951, %v949
  %v1046 = vpack.c.b16 %v954, %v952
  %v1047 = vpack.c.b16 %v955, %v953
  %v1048 = vpack.c.b16 %v958, %v956
  %v1049 = vpack.c.b16 %v959, %v957
  %v1050 = vpack.c.b16 %v962, %v960
  %v1051 = vpack.c.b16 %v963, %v961
  %v1052 = vpack.c.b16 %v966, %v964
  %v1053 = vpack.c.b16 %v967, %v965
  %v1054 = vpack.c.b16 %v970, %v968
  %v1055 = vpack.c.b16 %v971, %v969
  %v1056 = vpack.c.b16 %v974, %v972
  %v1057 = vpack.c.b16 %v975, %v973
  %v1058 = vpack.c.b16 %v978, %v976
  %v1059 = vpack.c.b16 %v979, %v977
  %1140 = vmatprep.subr.bf16.mxu0 %v981
  %1141 = vmatpush1.bf16.msra.mxu0 %v980
  %1142 = vmatprep.subr.bf16.mxu0 %v983
  %1143 = vmatpush1.bf16.msra.mxu0 %v982
  %1144 = vmatprep.subr.bf16.mxu0 %v985
  %1145 = vmatpush1.bf16.msra.mxu0 %v984
  %1146 = vmatprep.subr.bf16.mxu0 %v987
  %1147 = vmatpush1.bf16.msra.mxu0 %v986
  %1148 = vmatprep.subr.bf16.mxu0 %v989
  %1149 = vmatpush1.bf16.msra.mxu0 %v988
  %1150 = vmatprep.subr.bf16.mxu0 %v991
  %1151 = vmatpush1.bf16.msra.mxu0 %v990
  %1152 = vmatprep.subr.bf16.mxu0 %v993
  %1153 = vmatpush1.bf16.msra.mxu0 %v992
  %1154 = vmatprep.subr.bf16.mxu0 %v995
  %1155 = vmatpush1.bf16.msra.mxu0 %v994
  %1156 = vmatprep.subr.bf16.mxu0 %v997
  %1157 = vmatpush1.bf16.msra.mxu0 %v996
  %1158 = vmatprep.subr.bf16.mxu0 %v999
  %1159 = vmatpush1.bf16.msra.mxu0 %v998
  %1160 = vmatprep.subr.bf16.mxu0 %v1001
  %1161 = vmatpush1.bf16.msra.mxu0 %v1000
  %1162 = vmatprep.subr.bf16.mxu0 %v1003
  %1163 = vmatpush1.bf16.msra.mxu0 %v1002
  %1164 = vmatprep.subr.bf16.mxu0 %v1005
  %1165 = vmatpush1.bf16.msra.mxu0 %v1004
  %1166 = vmatprep.subr.bf16.mxu0 %v1007
  %1167 = vmatpush1.bf16.msra.mxu0 %v1006
  %1168 = vmatprep.subr.bf16.mxu0 %v1009
  %1169 = vmatpush1.bf16.msra.mxu0 %v1008
  %1170 = vmatprep.subr.bf16.mxu0 %v1011
  %1171 = vmatpush1.bf16.msra.mxu0 %v1010
  %1172 = vmatprep.mubr.bf16.mxu0 %v619
  %1173 = vmatmul.mubr.bf16.gmra.mrb[0].mxu0 %v606
  %v1174 = vpop.f32.mrb[0].mxu0
  %v1175 = vadd.f32 0.0, %v1174
  %v1176 = vpop.f32.mrb[0].mxu0
  %v1177 = vadd.f32 0.0, %v1176
  %v1178 = vpop.f32.mrb[0].mxu0
  %v1179 = vadd.f32 0.0, %v1178
  %v1180 = vpop.f32.mrb[0].mxu0
  %v1181 = vadd.f32 0.0, %v1180
  %1182 = vmatprep.mubr.bf16.mxu0 %v621
  %1183 = vmatmul.mubr.bf16.gmra.mrb[0].mxu0 %v607
  %v1184 = vpop.f32.mrb[0].mxu0
  %v1185 = vadd.f32 0.0, %v1184
  %v1186 = vpop.f32.mrb[0].mxu0
  %v1187 = vadd.f32 0.0, %v1186
  %v1188 = vpop.f32.mrb[0].mxu0
  %v1189 = vadd.f32 0.0, %v1188
  %v1190 = vpop.f32.mrb[0].mxu0
  %v1191 = vadd.f32 0.0, %v1190
  %1192 = vmatprep.mubr.bf16.mxu0 %v647
  %1193 = vmatmul.mubr.bf16.gmra.mrb[0].mxu0 %v643
  %v1194 = vpop.f32.mrb[0].mxu0
  %v1195 = vadd.f32 0.0, %v1194
  %v1196 = vpop.f32.mrb[0].mxu0
  %v1197 = vadd.f32 0.0, %v1196
  %v1198 = vpop.f32.mrb[0].mxu0
  %v1199 = vadd.f32 0.0, %v1198
  %v1200 = vpop.f32.mrb[0].mxu0
  %v1201 = vadd.f32 0.0, %v1200
  %1202 = vmatprep.mubr.bf16.mxu0 %v607
  %1203 = vmatmul.mubr.bf16.gmra.mrb[0].mxu0 %v610
  %v1204 = vpop.f32.mrb[0].mxu0
  %v1205 = vadd.f32 0.0, %v1204
  %v1206 = vpop.f32.mrb[0].mxu0
  %v1207 = vadd.f32 0.0, %v1206
  %v1208 = vpop.f32.mrb[0].mxu0
  %v1209 = vadd.f32 0.0, %v1208
  %v1210 = vpop.f32.mrb[0].mxu0
  %v1211 = vadd.f32 0.0, %v1210
  %1212 = vmatprep.mubr.bf16.mxu0 %v608
  %1213 = vmatmul.mubr.bf16.gmra.mrb[0].mxu0 %v611
  %v1214 = vpop.f32.mrb[0].mxu0
  %v1215 = vadd.f32 0.0, %v1214
  %v1216 = vpop.f32.mrb[0].mxu0
  %v1217 = vadd.f32 0.0, %v1216
  %v1218 = vpop.f32.mrb[0].mxu0
  %v1219 = vadd.f32 0.0, %v1218
  %v1220 = vpop.f32.mrb[0].mxu0
  %v1221 = vadd.f32 0.0, %v1220
  %1222 = vdwg.mxu0
  %1223 = vmatprep.subr.bf16.mxu0 %v1013
  %1224 = vmatpush1.bf16.msra.mxu0 %v1012
  %1225 = vmatprep.subr.bf16.mxu0 %v1015
  %1226 = vmatpush1.bf16.msra.mxu0 %v1014
  %1227 = vmatprep.subr.bf16.mxu0 %v1017
  %1228 = vmatpush1.bf16.msra.mxu0 %v1016
  %1229 = vmatprep.subr.bf16.mxu0 %v1019
  %1230 = vmatpush1.bf16.msra.mxu0 %v1018
  %1231 = vmatprep.subr.bf16.mxu0 %v1021
  %1232 = vmatpush1.bf16.msra.mxu0 %v1020
  %1233 = vmatprep.subr.bf16.mxu0 %v1023
  %1234 = vmatpush1.bf16.msra.mxu0 %v1022
  %1235 = vmatprep.subr.bf16.mxu0 %v1025
  %1236 = vmatpush1.bf16.msra.mxu0 %v1024
  %1237 = vmatprep.subr.bf16.mxu0 %v1027
  %1238 = vmatpush1.bf16.msra.mxu0 %v1026
  %1239 = vmatprep.subr.bf16.mxu0 %v1029
  %1240 = vmatpush1.bf16.msra.mxu0 %v1028
  %1241 = vmatprep.subr.bf16.mxu0 %v1031
  %1242 = vmatpush1.bf16.msra.mxu0 %v1030
  %1243 = vmatprep.subr.bf16.mxu0 %v1033
  %1244 = vmatpush1.bf16.msra.mxu0 %v1032
  %1245 = vmatprep.subr.bf16.mxu0 %v1035
  %1246 = vmatpush1.bf16.msra.mxu0 %v1034
  %1247 = vmatprep.subr.bf16.mxu0 %v1037
  %1248 = vmatpush1.bf16.msra.mxu0 %v1036
  %1249 = vmatprep.subr.bf16.mxu0 %v1039
  %1250 = vmatpush1.bf16.msra.mxu0 %v1038
  %1251 = vmatprep.subr.bf16.mxu0 %v1041
  %1252 = vmatpush1.bf16.msra.mxu0 %v1040
  %1253 = vmatprep.subr.bf16.mxu0 %v1043
  %1254 = vmatpush1.bf16.msra.mxu0 %v1042
  %1255 = vmatprep.mubr.bf16.mxu0 %v610
  %1256 = vmatmul.mubr.bf16.gmra.mrb[0].mxu0 %v629
  %v1257 = vpop.f32.mrb[0].mxu0
  %v1258 = vadd.f32 %v1175, %v1257
  %v1259 = vpop.f32.mrb[0].mxu0
  %v1260 = vadd.f32 %v1177, %v1259
  %v1261 = vpop.f32.mrb[0].mxu0
  %v1262 = vadd.f32 %v1179, %v1261
  %v1263 = vpop.f32.mrb[0].mxu0
  %v1264 = vadd.f32 %v1181, %v1263
  %1265 = vmatprep.mubr.bf16.mxu0 %v611
  %1266 = vmatmul.mubr.bf16.gmra.mrb[0].mxu0 %v631
  %v1267 = vpop.f32.mrb[0].mxu0
  %v1268 = vadd.f32 %v1185, %v1267
  %v1269 = vpop.f32.mrb[0].mxu0
  %v1270 = vadd.f32 %v1187, %v1269
  %v1271 = vpop.f32.mrb[0].mxu0
  %v1272 = vadd.f32 %v1189, %v1271
  %v1273 = vpop.f32.mrb[0].mxu0
  %v1274 = vadd.f32 %v1191, %v1273
  %1275 = vmatprep.mubr.bf16.mxu0 %v655
  %1276 = vmatmul.mubr.bf16.gmra.mrb[0].mxu0 %v651
  %v1277 = vpop.f32.mrb[0].mxu0
  %v1278 = vadd.f32 %v1195, %v1277
  %v1279 = vpop.f32.mrb[0].mxu0
  %v1280 = vadd.f32 %v1197, %v1279
  %v1281 = vpop.f32.mrb[0].mxu0
  %v1282 = vadd.f32 %v1199, %v1281
  %v1283 = vpop.f32.mrb[0].mxu0
  %v1284 = vadd.f32 %v1201, %v1283
  %1285 = vmatprep.mubr.bf16.mxu0 %v631
  %1286 = vmatmul.mubr.bf16.gmra.mrb[0].mxu0 %v621
  %v1287 = vpop.f32.mrb[0].mxu0
  %v1288 = vadd.f32 %v1205, %v1287
  %v1289 = vpop.f32.mrb[0].mxu0
  %v1290 = vadd.f32 %v1207, %v1289
  %v1291 = vpop.f32.mrb[0].mxu0
  %v1292 = vadd.f32 %v1209, %v1291
  %v1293 = vpop.f32.mrb[0].mxu0
  %v1294 = vadd.f32 %v1211, %v1293
  %1295 = vmatprep.mubr.bf16.mxu0 %v638
  %1296 = vmatmul.mubr.bf16.gmra.mrb[0].mxu0 %v636
  %v1297 = vpop.f32.mrb[0].mxu0
  %v1298 = vadd.f32 %v1215, %v1297
  %v1299 = vpop.f32.mrb[0].mxu0
  %v1300 = vadd.f32 %v1217, %v1299
  %v1301 = vpop.f32.mrb[0].mxu0
  %v1302 = vadd.f32 %v1219, %v1301
  %v1303 = vpop.f32.mrb[0].mxu0
  %v1304 = vadd.f32 %v1221, %v1303
  %1305 = vdwg.mxu0
  %1306 = vmatprep.subr.bf16.mxu0 %v1045
  %1307 = vmatpush1.bf16.msra.mxu0 %v1044
  %1308 = vmatprep.subr.bf16.mxu0 %v1047
  %1309 = vmatpush1.bf16.msra.mxu0 %v1046
  %1310 = vmatprep.subr.bf16.mxu0 %v1049
  %1311 = vmatpush1.bf16.msra.mxu0 %v1048
  %1312 = vmatprep.subr.bf16.mxu0 %v1051
  %1313 = vmatpush1.bf16.msra.mxu0 %v1050
  %1314 = vmatprep.subr.bf16.mxu0 %v1053
  %1315 = vmatpush1.bf16.msra.mxu0 %v1052
  %1316 = vmatprep.subr.bf16.mxu0 %v1055
  %1317 = vmatpush1.bf16.msra.mxu0 %v1054
  %1318 = vmatprep.subr.bf16.mxu0 %v1057
  %1319 = vmatpush1.bf16.msra.mxu0 %v1056
  %1320 = vmatprep.subr.bf16.mxu0 %v1059
  %1321 = vmatpush1.bf16.msra.mxu0 %v1058
  %1322 = vmatprep.subr.bf16.mxu0 0
  %1323 = vmatpush1.bf16.msra.mxu0 0
  %1324 = vmatprep.subr.bf16.mxu0 0
  %1325 = vmatpush1.bf16.msra.mxu0 0
  %1326 = vmatprep.subr.bf16.mxu0 0
  %1327 = vmatpush1.bf16.msra.mxu0 0
  %1328 = vmatprep.subr.bf16.mxu0 0
  %1329 = vmatpush1.bf16.msra.mxu0 0
  %1330 = vmatprep.subr.bf16.mxu0 0
  %1331 = vmatpush1.bf16.msra.mxu0 0
  %1332 = vmatprep.subr.bf16.mxu0 0
  %1333 = vmatpush1.bf16.msra.mxu0 0
  %1334 = vmatprep.subr.bf16.mxu0 0
  %1335 = vmatpush1.bf16.msra.mxu0 0
  %1336 = vmatprep.subr.bf16.mxu0 0
  %1337 = vmatpush1.bf16.msra.mxu0 0
  %1338 = vmatprep.mubr.bf16.mxu0 0
  %1339 = vmatmul.mubr.bf16.gmra.mrb[0].mxu0 %v607
  %v1340 = vpop.f32.mrb[0].mxu0
  %v1341 = vadd.f32 %v1258, %v1340
  %v1342 = vpop.f32.mrb[0].mxu0
  %v1343 = vadd.f32 %v1260, %v1342
  %v1344 = vpop.f32.mrb[0].mxu0
  %v1345 = vadd.f32 %v1262, %v1344
  %v1346 = vpop.f32.mrb[0].mxu0
  %v1347 = vadd.f32 %v1264, %v1346
  %1348 = vmatprep.mubr.bf16.mxu0 0
  %1349 = vmatmul.mubr.bf16.gmra.mrb[0].mxu0 %v608
  %v1350 = vpop.f32.mrb[0].mxu0
  %v1351 = vadd.f32 %v1268, %v1350
  %v1352 = vpop.f32.mrb[0].mxu0
  %v1353 = vadd.f32 %v1270, %v1352
  %v1354 = vpop.f32.mrb[0].mxu0
  %v1355 = vadd.f32 %v1272, %v1354
  %v1356 = vpop.f32.mrb[0].mxu0
  %v1357 = vadd.f32 %v1274, %v1356
  %1358 = vmatprep.mubr.bf16.mxu0 0
  %1359 = vmatmul.mubr.bf16.gmra.mrb[0].mxu0 %v658
  %v1360 = vpop.f32.mrb[0].mxu0
  %v1361 = vadd.f32 %v1278, %v1360
  %v1362 = vpop.f32.mrb[0].mxu0
  %v1363 = vadd.f32 %v1280, %v1362
  %v1364 = vpop.f32.mrb[0].mxu0
  %v1365 = vadd.f32 %v1282, %v1364
  %v1366 = vpop.f32.mrb[0].mxu0
  %v1367 = vadd.f32 %v1284, %v1366
  %1368 = vmatprep.mubr.bf16.mxu0 0
  %1369 = vmatmul.mubr.bf16.gmra.mrb[0].mxu0 %v611
  %v1370 = vpop.f32.mrb[0].mxu0
  %v1371 = vadd.f32 %v1288, %v1370
  %v1372 = vpop.f32.mrb[0].mxu0
  %v1373 = vadd.f32 %v1290, %v1372
  %v1374 = vpop.f32.mrb[0].mxu0
  %v1375 = vadd.f32 %v1292, %v1374
  %v1376 = vpop.f32.mrb[0].mxu0
  %v1377 = vadd.f32 %v1294, %v1376
  %1378 = vmatprep.mubr.bf16.mxu0 0
  %1379 = vmatmul.mubr.bf16.gmra.mrb[0].mxu0 %v612
  %v1380 = vpop.f32.mrb[0].mxu0
  %v1381 = vadd.f32 %v1298, %v1380
  %v1382 = vpop.f32.mrb[0].mxu0
  %v1383 = vadd.f32 %v1300, %v1382
  %v1384 = vpop.f32.mrb[0].mxu0
  %v1385 = vadd.f32 %v1302, %v1384
  %v1386 = vpop.f32.mrb[0].mxu0
  %v1387 = vadd.f32 %v1304, %v1386
  %1388 = vdwg.mxu0
  %v1389 = vmax.f32 %v1341, %v1343
  %v1390 = vmax.f32 %v1345, %v1347
  %v1391 = vmax.f32 %v1351, %v1353
  %v1392 = vmax.f32 %v1355, %v1357
  %v1393 = vmax.f32 %v1361, %v1363
  %v1394 = vmax.f32 %v1365, %v1367
  %v1395 = vmax.f32 %v1371, %v1373
  %v1396 = vmax.f32 %v1375, %v1377
  %v1397 = vmax.f32 %v1381, %v1383
  %v1398 = vmax.f32 %v1385, %v1387
  %v1399 = vmax.f32 %v1389, %v1394
  %v1400 = vmax.f32 %v1390, %v1395
  %v1401 = vmax.f32 %v1391, %v1396
  %v1402 = vmax.f32 %v1392, %v1397
  %v1403 = vmax.f32 %v1393, %v1398
  %v1404 = vld [vmem:[%s4] sm:$0x1]
  %v1406 = vlaneseq
  %v1407 = vshrl.u32 %v1406, 7
  %v1408 = vsub.s32 0, %v1407
  %v1409 = vrot.slane %v1404, %v1408
  %v1411 = vadd.f32 %v1399, %v1409
  %v1412 = vadd.f32 %v1400, %v1409
  %v1413 = vadd.f32 %v1401, %v1409
  %v1414 = vadd.f32 %v1402, %v1409
  %v1415 = vadd.f32 %v1403, %v1409
  %v1416 = vmax.f32 %v1411, 0.0
  %v1417 = vmax.f32 %v1412, 0.0
  %v1418 = vmax.f32 %v1413, 0.0
  %v1419 = vmax.f32 %v1414, 0.0
  %v1420 = vmax.f32 %v1415, 0.0
  %v1421 = vpack.c.bf16 %v1417, %v1416
  %v1422 = vpack.c.bf16 %v1419, %v1418
  %v1423 = vpack.c.bf16 %v1420, %v1420
  %v1425 = vrot.slane %v1421, 4
  %v1428 = vrot.slane %v1422, 4
  %v1430 = vld [vmem:[%s5] sm:$0xf]
  %v1431 = vld [vmem:[%s5 + $0x4] sm:$0xf]
  %v1432 = vld [vmem:[%s5 + $0x8] sm:$0xf]
  %v1433 = vld [vmem:[%s5 + $0xc] sm:$0xf]
  %v1434 = vld [vmem:[%s5 + $0x10] sm:$0xf]
  %v1435 = vld [vmem:[%s5 + $0x14] sm:$0xf]
  %v1436 = vld [vmem:[%s5 + $0x18] sm:$0xf]
  %v1437 = vld [vmem:[%s5 + $0x1c] sm:$0xf]
  %v1438 = vld [vmem:[%s5 + $0x20] sm:$0xf]
  %v1439 = vld [vmem:[%s5 + $0x24] sm:$0xf]
  %v1440 = vld [vmem:[%s5 + $0x28] sm:$0xf]
  %v1441 = vld [vmem:[%s5 + $0x2c] sm:$0xf]
  %v1442 = vld [vmem:[%s5 + $0x30] sm:$0xf]
  %v1443 = vld [vmem:[%s5 + $0x34] sm:$0xf]
  %v1444 = vld [vmem:[%s5 + $0x38] sm:$0xf]
  %v1445 = vld [vmem:[%s5 + $0x3c] sm:$0xf]
  %v1446 = vld [vmem:[%s5 + $0x40] sm:$0xf]
  %v1447 = vld [vmem:[%s5 + $0x44] sm:$0xf]
  %v1448 = vld [vmem:[%s5 + $0x48] sm:$0xf]
  %v1449 = vld [vmem:[%s5 + $0x4c] sm:$0xf]
  %v1450 = vld [vmem:[%s5 + $0x50] sm:$0xf]
  %v1451 = vld [vmem:[%s5 + $0x54] sm:$0xf]
  %v1452 = vld [vmem:[%s5 + $0x58] sm:$0xf]
  %v1453 = vld [vmem:[%s5 + $0x5c] sm:$0xf]
  %v1454 = vld [vmem:[%s5 + $0x60] sm:$0xf]
  %v1455 = vld [vmem:[%s5 + $0x64] sm:$0xf]
  %v1456 = vld [vmem:[%s5 + $0x68] sm:$0xf]
  %v1457 = vld [vmem:[%s5 + $0x6c] sm:$0xf]
  %v1458 = vld [vmem:[%s5 + $0x70] sm:$0xf]
  %v1459 = vld [vmem:[%s5 + $0x74] sm:$0xf]
  %v1460 = vld [vmem:[%s5 + $0x78] sm:$0xf]
  %v1461 = vld [vmem:[%s5 + $0x7c] sm:$0xf]
  %v1462 = vld [vmem:[%s5 + $0x80] sm:$0xf]
  %v1463 = vld [vmem:[%s5 + $0x84] sm:$0xf]
  %v1464 = vld [vmem:[%s5 + $0x88] sm:$0xf]
  %v1465 = vld [vmem:[%s5 + $0x8c] sm:$0xf]
  %v1466 = vld [vmem:[%s5 + $0x90] sm:$0xf]
  %v1467 = vld [vmem:[%s5 + $0x94] sm:$0xf]
  %v1468 = vld [vmem:[%s5 + $0x98] sm:$0xf]
  %v1469 = vld [vmem:[%s5 + $0x9c] sm:$0xf]
  %v1470 = vld [vmem:[%s5 + $0xa0] sm:$0xf]
  %v1471 = vld [vmem:[%s5 + $0xa4] sm:$0xf]
  %v1472 = vld [vmem:[%s5 + $0xa8] sm:$0xf]
  %v1473 = vld [vmem:[%s5 + $0xac] sm:$0xf]
  %v1474 = vld [vmem:[%s5 + $0xb0] sm:$0xf]
  %v1475 = vld [vmem:[%s5 + $0xb4] sm:$0xf]
  %v1476 = vld [vmem:[%s5 + $0xb8] sm:$0xf]
  %v1477 = vld [vmem:[%s5 + $0xbc] sm:$0xf]
  %v1478 = vld [vmem:[%s5 + $0xc0] sm:$0xf]
  %v1479 = vld [vmem:[%s5 + $0xc4] sm:$0xf]
  %v1480 = vld [vmem:[%s5 + $0xc8] sm:$0xf]
  %v1481 = vld [vmem:[%s5 + $0xcc] sm:$0xf]
  %v1482 = vld [vmem:[%s5 + $0xd0] sm:$0xf]
  %v1483 = vld [vmem:[%s5 + $0xd4] sm:$0xf]
  %v1484 = vld [vmem:[%s5 + $0xd8] sm:$0xf]
  %v1485 = vld [vmem:[%s5 + $0xdc] sm:$0xf]
  %v1486 = vld [vmem:[%s5 + $0xe0] sm:$0xf]
  %v1487 = vld [vmem:[%s5 + $0xe4] sm:$0xf]
  %v1488 = vld [vmem:[%s5 + $0xe8] sm:$0xf]
  %v1489 = vld [vmem:[%s5 + $0xec] sm:$0xf]
  %v1490 = vld [vmem:[%s5 + $0xf0] sm:$0xf]
  %v1491 = vld [vmem:[%s5 + $0xf4] sm:$0xf]
  %v1492 = vld [vmem:[%s5 + $0xf8] sm:$0xf]
  %v1493 = vld [vmem:[%s5 + $0xfc] sm:$0xf]
  %v1494 = vld [vmem:[%s5 + $0x100] sm:$0xf]
  %v1495 = vld [vmem:[%s5 + $0x104] sm:$0xf]
  %v1496 = vld [vmem:[%s5 + $0x108] sm:$0xf]
  %v1497 = vld [vmem:[%s5 + $0x10c] sm:$0xf]
  %v1498 = vld [vmem:[%s5 + $0x110] sm:$0xf]
  %v1499 = vld [vmem:[%s5 + $0x114] sm:$0xf]
  %v1500 = vld [vmem:[%s5 + $0x118] sm:$0xf]
  %v1501 = vld [vmem:[%s5 + $0x11c] sm:$0xf]
  %v1502 = vld [vmem:[%s5 + $0x120] sm:$0xf]
  %v1503 = vld [vmem:[%s5 + $0x124] sm:$0xf]
  %v1504 = vld [vmem:[%s5 + $0x128] sm:$0xf]
  %v1505 = vld [vmem:[%s5 + $0x12c] sm:$0xf]
  %v1506 = vld [vmem:[%s5 + $0x130] sm:$0xf]
  %v1507 = vld [vmem:[%s5 + $0x134] sm:$0xf]
  %v1508 = vld [vmem:[%s5 + $0x138] sm:$0xf]
  %v1509 = vld [vmem:[%s5 + $0x13c] sm:$0xf]
  %v1510 = vld [vmem:[%s6] sm:$0x1]
  %v1512 = vlaneseq
  %v1513 = vshrl.u32 %v1512, 7
  %v1514 = vsub.s32 0, %v1513
  %v1515 = vrot.slane %v1510, %v1514
  %v1597 = vunpack.c.l.b16 %v1430
  %v1598 = vunpack.c.l.b16 %v1431
  %v1599 = vunpack.c.l.b16 %v1432
  %v1600 = vunpack.c.l.b16 %v1433
  %v1601 = vunpack.c.l.b16 %v1434
  %v1602 = vunpack.c.l.b16 %v1435
  %v1603 = vunpack.c.l.b16 %v1436
  %v1604 = vunpack.c.l.b16 %v1437
  %v1605 = vunpack.c.l.b16 %v1438
  %v1606 = vunpack.c.l.b16 %v1439
  %v1607 = vunpack.c.l.b16 %v1440
  %v1608 = vunpack.c.l.b16 %v1441
  %v1609 = vunpack.c.l.b16 %v1442
  %v1610 = vunpack.c.l.b16 %v1443
  %v1611 = vunpack.c.l.b16 %v1444
  %v1612 = vunpack.c.l.b16 %v1445
  %v1613 = vunpack.c.l.b16 %v1446
  %v1614 = vunpack.c.l.b16 %v1447
  %v1615 = vunpack.c.l.b16 %v1448
  %v1616 = vunpack.c.l.b16 %v1449
  %v1617 = vunpack.c.l.b16 %v1450
  %v1618 = vunpack.c.l.b16 %v1451
  %v1619 = vunpack.c.l.b16 %v1452
  %v1620 = vunpack.c.l.b16 %v1453
  %v1621 = vunpack.c.l.b16 %v1454
  %v1622 = vunpack.c.l.b16 %v1455
  %v1623 = vunpack.c.l.b16 %v1456
  %v1624 = vunpack.c.l.b16 %v1457
  %v1625 = vunpack.c.l.b16 %v1458
  %v1626 = vunpack.c.l.b16 %v1459
  %v1627 = vunpack.c.l.b16 %v1460
  %v1628 = vunpack.c.l.b16 %v1461
  %v1629 = vunpack.c.l.b16 %v1462
  %v1630 = vunpack.c.l.b16 %v1463
  %v1631 = vunpack.c.l.b16 %v1464
  %v1632 = vunpack.c.l.b16 %v1465
  %v1633 = vunpack.c.l.b16 %v1466
  %v1634 = vunpack.c.l.b16 %v1467
  %v1635 = vunpack.c.l.b16 %v1468
  %v1636 = vunpack.c.l.b16 %v1469
  %v1637 = vunpack.c.l.b16 %v1470
  %v1638 = vunpack.c.l.b16 %v1471
  %v1639 = vunpack.c.l.b16 %v1472
  %v1640 = vunpack.c.l.b16 %v1473
  %v1641 = vunpack.c.l.b16 %v1474
  %v1642 = vunpack.c.l.b16 %v1475
  %v1643 = vunpack.c.l.b16 %v1476
  %v1644 = vunpack.c.l.b16 %v1477
  %v1645 = vunpack.c.l.b16 %v1478
  %v1646 = vunpack.c.l.b16 %v1479
  %v1647 = vunpack.c.l.b16 %v1480
  %v1648 = vunpack.c.l.b16 %v1481
  %v1649 = vunpack.c.l.b16 %v1482
  %v1650 = vunpack.c.l.b16 %v1483
  %v1651 = vunpack.c.l.b16 %v1484
  %v1652 = vunpack.c.l.b16 %v1485
  %v1653 = vunpack.c.l.b16 %v1486
  %v1654 = vunpack.c.l.b16 %v1487
  %v1655 = vunpack.c.l.b16 %v1488
  %v1656 = vunpack.c.l.b16 %v1489
  %v1657 = vunpack.c.l.b16 %v1490
  %v1658 = vunpack.c.l.b16 %v1491
  %v1659 = vunpack.c.l.b16 %v1492
  %v1660 = vunpack.c.l.b16 %v1493
  %v1661 = vunpack.c.l.b16 %v1494
  %v1662 = vunpack.c.l.b16 %v1495
  %v1663 = vunpack.c.l.b16 %v1496
  %v1664 = vunpack.c.l.b16 %v1497
  %v1665 = vunpack.c.l.b16 %v1498
  %v1666 = vunpack.c.l.b16 %v1499
  %v1667 = vunpack.c.l.b16 %v1500
  %v1668 = vunpack.c.l.b16 %v1501
  %v1669 = vunpack.c.l.b16 %v1502
  %v1670 = vunpack.c.l.b16 %v1503
  %v1671 = vunpack.c.l.b16 %v1504
  %v1672 = vunpack.c.l.b16 %v1505
  %v1673 = vunpack.c.l.b16 %v1506
  %v1674 = vunpack.c.l.b16 %v1507
  %v1675 = vunpack.c.l.b16 %v1508
  %v1676 = vunpack.c.l.b16 %v1509
  %v1677 = vpack.c.b16 %v1598, %v1597
  %v1678 = vpack.c.b16 %v1600, %v1599
  %v1679 = vpack.c.b16 %v1602, %v1601
  %v1680 = vpack.c.b16 %v1604, %v1603
  %v1681 = vpack.c.b16 %v1606, %v1605
  %v1682 = vpack.c.b16 %v1608, %v1607
  %v1683 = vpack.c.b16 %v1610, %v1609
  %v1684 = vpack.c.b16 %v1612, %v1611
  %v1685 = vpack.c.b16 %v1614, %v1613
  %v1686 = vpack.c.b16 %v1616, %v1615
  %v1687 = vpack.c.b16 %v1618, %v1617
  %v1688 = vpack.c.b16 %v1620, %v1619
  %v1689 = vpack.c.b16 %v1622, %v1621
  %v1690 = vpack.c.b16 %v1624, %v1623
  %v1691 = vpack.c.b16 %v1626, %v1625
  %v1692 = vpack.c.b16 %v1628, %v1627
  %v1693 = vpack.c.b16 %v1630, %v1629
  %v1694 = vpack.c.b16 %v1632, %v1631
  %v1695 = vpack.c.b16 %v1634, %v1633
  %v1696 = vpack.c.b16 %v1636, %v1635
  %v1697 = vpack.c.b16 %v1638, %v1637
  %v1698 = vpack.c.b16 %v1640, %v1639
  %v1699 = vpack.c.b16 %v1642, %v1641
  %v1700 = vpack.c.b16 %v1644, %v1643
  %v1701 = vpack.c.b16 %v1646, %v1645
  %v1702 = vpack.c.b16 %v1648, %v1647
  %v1703 = vpack.c.b16 %v1650, %v1649
  %v1704 = vpack.c.b16 %v1652, %v1651
  %v1705 = vpack.c.b16 %v1654, %v1653
  %v1706 = vpack.c.b16 %v1656, %v1655
  %v1707 = vpack.c.b16 %v1658, %v1657
  %v1708 = vpack.c.b16 %v1660, %v1659
  %v1709 = vpack.c.b16 %v1662, %v1661
  %v1710 = vpack.c.b16 %v1664, %v1663
  %v1711 = vpack.c.b16 %v1666, %v1665
  %v1712 = vpack.c.b16 %v1668, %v1667
  %v1713 = vpack.c.b16 %v1670, %v1669
  %v1714 = vpack.c.b16 %v1672, %v1671
  %v1715 = vpack.c.b16 %v1674, %v1673
  %v1716 = vpack.c.b16 %v1676, %v1675
  %1757 = vmatprep.subr.bf16.mxu0 0
  %1758 = vmatpush1.bf16.msra.mxu0 %v1677
  %1759 = vmatprep.subr.bf16.mxu0 0
  %1760 = vmatpush1.bf16.msra.mxu0 %v1678
  %1761 = vmatprep.subr.bf16.mxu0 0
  %1762 = vmatpush1.bf16.msra.mxu0 %v1679
  %1763 = vmatprep.subr.bf16.mxu0 0
  %1764 = vmatpush1.bf16.msra.mxu0 %v1680
  %1765 = vmatprep.subr.bf16.mxu0 0
  %1766 = vmatpush1.bf16.msra.mxu0 %v1681
  %1767 = vmatprep.subr.bf16.mxu0 0
  %1768 = vmatpush1.bf16.msra.mxu0 %v1682
  %1769 = vmatprep.subr.bf16.mxu0 0
  %1770 = vmatpush1.bf16.msra.mxu0 %v1683
  %1771 = vmatprep.subr.bf16.mxu0 0
  %1772 = vmatpush1.bf16.msra.mxu0 %v1684
  %1773 = vmatprep.subr.bf16.mxu0 0
  %1774 = vmatpush1.bf16.msra.mxu0 %v1685
  %1775 = vmatprep.subr.bf16.mxu0 0
  %1776 = vmatpush1.bf16.msra.mxu0 %v1686
  %1777 = vmatprep.subr.bf16.mxu0 0
  %1778 = vmatpush1.bf16.msra.mxu0 %v1687
  %1779 = vmatprep.subr.bf16.mxu0 0
  %1780 = vmatpush1.bf16.msra.mxu0 %v1688
  %1781 = vmatprep.subr.bf16.mxu0 0
  %1782 = vmatpush1.bf16.msra.mxu0 %v1689
  %1783 = vmatprep.subr.bf16.mxu0 0
  %1784 = vmatpush1.bf16.msra.mxu0 %v1690
  %1785 = vmatprep.subr.bf16.mxu0 0
  %1786 = vmatpush1.bf16.msra.mxu0 %v1691
  %1787 = vmatprep.subr.bf16.mxu0 0
  %1788 = vmatpush1.bf16.msra.mxu0 %v1692
  %1789 = vmatprep.mubr.bf16.mxu0 %v1425
  %1790 = vmatmul.mubr.bf16.gmra.mrb[0].mxu0 %v1421
  %v1791 = vpop.f32.mrb[0].mxu0
  %v1792 = vadd.f32 %v1515, %v1791
  %v1793 = vpop.f32.mrb[0].mxu0
  %v1794 = vpop.f32.mrb[0].mxu0
  %v1795 = vpop.f32.mrb[0].mxu0
  %1796 = vdwg.mxu0
  %1797 = vmatprep.subr.bf16.mxu0 0
  %1798 = vmatpush1.bf16.msra.mxu0 %v1693
  %1799 = vmatprep.subr.bf16.mxu0 0
  %1800 = vmatpush1.bf16.msra.mxu0 %v1694
  %1801 = vmatprep.subr.bf16.mxu0 0
  %1802 = vmatpush1.bf16.msra.mxu0 %v1695
  %1803 = vmatprep.subr.bf16.mxu0 0
  %1804 = vmatpush1.bf16.msra.mxu0 %v1696
  %1805 = vmatprep.subr.bf16.mxu0 0
  %1806 = vmatpush1.bf16.msra.mxu0 %v1697
  %1807 = vmatprep.subr.bf16.mxu0 0
  %1808 = vmatpush1.bf16.msra.mxu0 %v1698
  %1809 = vmatprep.subr.bf16.mxu0 0
  %1810 = vmatpush1.bf16.msra.mxu0 %v1699
  %1811 = vmatprep.subr.bf16.mxu0 0
  %1812 = vmatpush1.bf16.msra.mxu0 %v1700
  %1813 = vmatprep.subr.bf16.mxu0 0
  %1814 = vmatpush1.bf16.msra.mxu0 %v1701
  %1815 = vmatprep.subr.bf16.mxu0 0
  %1816 = vmatpush1.bf16.msra.mxu0 %v1702
  %1817 = vmatprep.subr.bf16.mxu0 0
  %1818 = vmatpush1.bf16.msra.mxu0 %v1703
  %1819 = vmatprep.subr.bf16.mxu0 0
  %1820 = vmatpush1.bf16.msra.mxu0 %v1704
  %1821 = vmatprep.subr.bf16.mxu0 0
  %1822 = vmatpush1.bf16.msra.mxu0 %v1705
  %1823 = vmatprep.subr.bf16.mxu0 0
  %1824 = vmatpush1.bf16.msra.mxu0 %v1706
  %1825 = vmatprep.subr.bf16.mxu0 0
  %1826 = vmatpush1.bf16.msra.mxu0 %v1707
  %1827 = vmatprep.subr.bf16.mxu0 0
  %1828 = vmatpush1.bf16.msra.mxu0 %v1708
  %1829 = vmatprep.mubr.bf16.mxu0 %v1428
  %1830 = vmatmul.mubr.bf16.gmra.mrb[0].mxu0 %v1422
  %v1831 = vpop.f32.mrb[0].mxu0
  %v1832 = vadd.f32 %v1792, %v1831
  %v1833 = vpop.f32.mrb[0].mxu0
  %v1834 = vpop.f32.mrb[0].mxu0
  %v1835 = vpop.f32.mrb[0].mxu0
  %1836 = vdwg.mxu0
  %1837 = vmatprep.subr.bf16.mxu0 0
  %1838 = vmatpush1.bf16.msra.mxu0 %v1709
  %1839 = vmatprep.subr.bf16.mxu0 0
  %1840 = vmatpush1.bf16.msra.mxu0 %v1710
  %1841 = vmatprep.subr.bf16.mxu0 0
  %1842 = vmatpush1.bf16.msra.mxu0 %v1711
  %1843 = vmatprep.subr.bf16.mxu0 0
  %1844 = vmatpush1.bf16.msra.mxu0 %v1712
  %1845 = vmatprep.subr.bf16.mxu0 0
  %1846 = vmatpush1.bf16.msra.mxu0 %v1713
  %1847 = vmatprep.subr.bf16.mxu0 0
  %1848 = vmatpush1.bf16.msra.mxu0 %v1714
  %1849 = vmatprep.subr.bf16.mxu0 0
  %1850 = vmatpush1.bf16.msra.mxu0 %v1715
  %1851 = vmatprep.subr.bf16.mxu0 0
  %1852 = vmatpush1.bf16.msra.mxu0 %v1716
  %1853 = vmatprep.subr.bf16.mxu0 0
  %1854 = vmatpush1.bf16.msra.mxu0 0
  %1855 = vmatprep.subr.bf16.mxu0 0
  %1856 = vmatpush1.bf16.msra.mxu0 0
  %1857 = vmatprep.subr.bf16.mxu0 0
  %1858 = vmatpush1.bf16.msra.mxu0 0
  %1859 = vmatprep.subr.bf16.mxu0 0
  %1860 = vmatpush1.bf16.msra.mxu0 0
  %1861 = vmatprep.subr.bf16.mxu0 0
  %1862 = vmatpush1.bf16.msra.mxu0 0
  %1863 = vmatprep.subr.bf16.mxu0 0
  %1864 = vmatpush1.bf16.msra.mxu0 0
  %1865 = vmatprep.subr.bf16.mxu0 0
  %1866 = vmatpush1.bf16.msra.mxu0 0
  %1867 = vmatprep.subr.bf16.mxu0 0
  %1868 = vmatpush1.bf16.msra.mxu0 0
  %1869 = vmatprep.mubr.bf16.mxu0 0
  %1870 = vmatmul.mubr.bf16.gmra.mrb[0].mxu0 %v1423
  %v1871 = vpop.f32.mrb[0].mxu0
  %v1872 = vadd.f32 %v1832, %v1871
  %v1873 = vpop.f32.mrb[0].mxu0
  %v1874 = vpop.f32.mrb[0].mxu0
  %v1875 = vpop.f32.mrb[0].mxu0
  %1876 = vdwg.mxu0
  %v1877 = vmax.f32 %v1872, 0.0
  %v1878 = vpack.c.bf16 %v1877, %v1877
  %v1879 = vld [vmem:[%s7] sm:$0xf]
  %v1880 = vld [vmem:[%s7 + $0x4] sm:$0xf]
  %v1881 = vld [vmem:[%s7 + $0x8] sm:$0xf]
  %v1882 = vld [vmem:[%s7 + $0xc] sm:$0xf]
  %v1883 = vld [vmem:[%s7 + $0x10] sm:$0xf]
  %v1884 = vld [vmem:[%s7 + $0x14] sm:$0xf]
  %v1885 = vld [vmem:[%s7 + $0x18] sm:$0xf]
  %v1886 = vld [vmem:[%s7 + $0x1c] sm:$0xf]
  %v1887 = vld [vmem:[%s7 + $0x20] sm:$0xf]
  %v1888 = vld [vmem:[%s7 + $0x24] sm:$0xf]
  %v1889 = vld [vmem:[%s7 + $0x28] sm:$0xf]
  %v1890 = vld [vmem:[%s7 + $0x2c] sm:$0xf]
  %v1891 = vld [vmem:[%s7 + $0x30] sm:$0xf]
  %v1892 = vld [vmem:[%s7 + $0x34] sm:$0xf]
  %v1893 = vld [vmem:[%s7 + $0x38] sm:$0xf]
  %v1894 = vld [vmem:[%s7 + $0x3c] sm:$0xf]
  %v1895 = vld [vmem:[%s8] sm:$0x1]
  %v1897 = vlaneseq
  %v1898 = vshrl.u32 %v1897, 7
  %v1899 = vsub.s32 0, %v1898
  %v1900 = vrot.slane %v1895, %v1899
  %v1918 = vunpack.c.l.b16 %v1879
  %v1919 = vunpack.c.l.b16 %v1880
  %v1920 = vunpack.c.l.b16 %v1881
  %v1921 = vunpack.c.l.b16 %v1882
  %v1922 = vunpack.c.l.b16 %v1883
  %v1923 = vunpack.c.l.b16 %v1884
  %v1924 = vunpack.c.l.b16 %v1885
  %v1925 = vunpack.c.l.b16 %v1886
  %v1926 = vunpack.c.l.b16 %v1887
  %v1927 = vunpack.c.l.b16 %v1888
  %v1928 = vunpack.c.l.b16 %v1889
  %v1929 = vunpack.c.l.b16 %v1890
  %v1930 = vunpack.c.l.b16 %v1891
  %v1931 = vunpack.c.l.b16 %v1892
  %v1932 = vunpack.c.l.b16 %v1893
  %v1933 = vunpack.c.l.b16 %v1894
  %v1934 = vpack.c.b16 %v1919, %v1918
  %v1935 = vpack.c.b16 %v1921, %v1920
  %v1936 = vpack.c.b16 %v1923, %v1922
  %v1937 = vpack.c.b16 %v1925, %v1924
  %v1938 = vpack.c.b16 %v1927, %v1926
  %v1939 = vpack.c.b16 %v1929, %v1928
  %v1940 = vpack.c.b16 %v1931, %v1930
  %v1941 = vpack.c.b16 %v1933, %v1932
  %1950 = vmatprep.subr.bf16.mxu0 0
  %1951 = vmatpush1.bf16.msra.mxu0 %v1934
  %1952 = vmatprep.subr.bf16.mxu0 0
  %1953 = vmatpush1.bf16.msra.mxu0 %v1935
  %1954 = vmatprep.subr.bf16.mxu0 0
  %1955 = vmatpush1.bf16.msra.mxu0 %v1936
  %1956 = vmatprep.subr.bf16.mxu0 0
  %1957 = vmatpush1.bf16.msra.mxu0 %v1937
  %1958 = vmatprep.subr.bf16.mxu0 0
  %1959 = vmatpush1.bf16.msra.mxu0 %v1938
  %1960 = vmatprep.subr.bf16.mxu0 0
  %1961 = vmatpush1.bf16.msra.mxu0 %v1939
  %1962 = vmatprep.subr.bf16.mxu0 0
  %1963 = vmatpush1.bf16.msra.mxu0 %v1940
  %1964 = vmatprep.subr.bf16.mxu0 0
  %1965 = vmatpush1.bf16.msra.mxu0 %v1941
  %1966 = vmatprep.subr.bf16.mxu0 0
  %1967 = vmatpush1.bf16.msra.mxu0 0
  %1968 = vmatprep.subr.bf16.mxu0 0
  %1969 = vmatpush1.bf16.msra.mxu0 0
  %1970 = vmatprep.subr.bf16.mxu0 0
  %1971 = vmatpush1.bf16.msra.mxu0 0
  %1972 = vmatprep.subr.bf16.mxu0 0
  %1973 = vmatpush1.bf16.msra.mxu0 0
  %1974 = vmatprep.subr.bf16.mxu0 0
  %1975 = vmatpush1.bf16.msra.mxu0 0
  %1976 = vmatprep.subr.bf16.mxu0 0
  %1977 = vmatpush1.bf16.msra.mxu0 0
  %1978 = vmatprep.subr.bf16.mxu0 0
  %1979 = vmatpush1.bf16.msra.mxu0 0
  %1980 = vmatprep.subr.bf16.mxu0 0
  %1981 = vmatpush1.bf16.msra.mxu0 0
  %1982 = vmatprep.mubr.bf16.mxu0 0
  %1983 = vmatmul.mubr.bf16.gmra.mrb[0].mxu0 %v1878
  %v1984 = vpop.f32.mrb[0].mxu0
  %v1985 = vadd.f32 %v1900, %v1984
  %v1986 = vpop.f32.mrb[0].mxu0
  %v1987 = vpop.f32.mrb[0].mxu0
  %v1988 = vpop.f32.mrb[0].mxu0
  %1989 = vdwg.mxu0
  %v1990 = vmax.f32 %v1985, 0.0
  %v1991 = vpack.c.bf16 %v1990, %v1990
  %v1992 = vld [vmem:[%s9] sm:$0xf]
  %v1993 = vld [vmem:[%s9 + $0x4] sm:$0xf]
  %v1994 = vld [vmem:[%s9 + $0x8] sm:$0xf]
  %v1995 = vld [vmem:[%s9 + $0xc] sm:$0xf]
  %v1996 = vld [vmem:[%s9 + $0x10] sm:$0xf]
  %v1997 = vld [vmem:[%s9 + $0x14] sm:$0xf]
  %v1998 = vld [vmem:[%s9 + $0x18] sm:$0xf]
  %v1999 = vld [vmem:[%s9 + $0x1c] sm:$0xf]
  %v2000 = vld [vmem:[%s9 + $0x20] sm:$0xf]
  %v2001 = vld [vmem:[%s9 + $0x24] sm:$0xf]
  %v2002 = vld [vmem:[%s9 + $0x28] sm:$0xf]
  %v2003 = vld [vmem:[%s9 + $0x2c] sm:$0xf]
  %v2004 = vld [vmem:[%s9 + $0x30] sm:$0xf]
  %v2005 = vld [vmem:[%s9 + $0x34] sm:$0xf]
  %v2006 = vld [vmem:[%s9 + $0x38] sm:$0xf]
  %v2007 = vld [vmem:[%s9 + $0x3c] sm:$0xf]
  %v2008 = vld [vmem:[%s10] sm:$0x1]
  %v2010 = vlaneseq
  %v2011 = vshrl.u32 %v2010, 7
  %v2012 = vsub.s32 0, %v2011
  %v2013 = vrot.slane %v2008, %v2012
  %v2031 = vunpack.c.l.b16 %v1992
  %v2032 = vunpack.c.l.b16 %v1993
  %v2033 = vunpack.c.l.b16 %v1994
  %v2034 = vunpack.c.l.b16 %v1995
  %v2035 = vunpack.c.l.b16 %v1996
  %v2036 = vunpack.c.l.b16 %v1997
  %v2037 = vunpack.c.l.b16 %v1998
  %v2038 = vunpack.c.l.b16 %v1999
  %v2039 = vunpack.c.l.b16 %v2000
  %v2040 = vunpack.c.l.b16 %v2001
  %v2041 = vunpack.c.l.b16 %v2002
  %v2042 = vunpack.c.l.b16 %v2003
  %v2043 = vunpack.c.l.b16 %v2004
  %v2044 = vunpack.c.l.b16 %v2005
  %v2045 = vunpack.c.l.b16 %v2006
  %v2046 = vunpack.c.l.b16 %v2007
  %v2047 = vpack.c.b16 %v2032, %v2031
  %v2048 = vpack.c.b16 %v2034, %v2033
  %v2049 = vpack.c.b16 %v2036, %v2035
  %v2050 = vpack.c.b16 %v2038, %v2037
  %v2051 = vpack.c.b16 %v2040, %v2039
  %v2052 = vpack.c.b16 %v2042, %v2041
  %v2053 = vpack.c.b16 %v2044, %v2043
  %v2054 = vpack.c.b16 %v2046, %v2045
  %2063 = vmatprep.subr.bf16.mxu0 0
  %2064 = vmatpush1.bf16.msra.mxu0 %v2047
  %2065 = vmatprep.subr.bf16.mxu0 0
  %2066 = vmatpush1.bf16.msra.mxu0 %v2048
  %2067 = vmatprep.subr.bf16.mxu0 0
  %2068 = vmatpush1.bf16.msra.mxu0 %v2049
  %2069 = vmatprep.subr.bf16.mxu0 0
  %2070 = vmatpush1.bf16.msra.mxu0 %v2050
  %2071 = vmatprep.subr.bf16.mxu0 0
  %2072 = vmatpush1.bf16.msra.mxu0 %v2051
  %2073 = vmatprep.subr.bf16.mxu0 0
  %2074 = vmatpush1.bf16.msra.mxu0 %v2052
  %2075 = vmatprep.subr.bf16.mxu0 0
  %2076 = vmatpush1.bf16.msra.mxu0 %v2053
  %2077 = vmatprep.subr.bf16.mxu0 0
  %2078 = vmatpush1.bf16.msra.mxu0 %v2054
  %2079 = vmatprep.subr.bf16.mxu0 0
  %2080 = vmatpush1.bf16.msra.mxu0 0
  %2081 = vmatprep.subr.bf16.mxu0 0
  %2082 = vmatpush1.bf16.msra.mxu0 0
  %2083 = vmatprep.subr.bf16.mxu0 0
  %2084 = vmatpush1.bf16.msra.mxu0 0
  %2085 = vmatprep.subr.bf16.mxu0 0
  %2086 = vmatpush1.bf16.msra.mxu0 0
  %2087 = vmatprep.subr.bf16.mxu0 0
  %2088 = vmatpush1.bf16.msra.mxu0 0
  %2089 = vmatprep.subr.bf16.mxu0 0
  %2090 = vmatpush1.bf16.msra.mxu0 0
  %2091 = vmatprep.subr.bf16.mxu0 0
  %2092 = vmatpush1.bf16.msra.mxu0 0
  %2093 = vmatprep.subr.bf16.mxu0 0
  %2094 = vmatpush1.bf16.msra.mxu0 0
  %2095 = vmatprep.mubr.bf16.mxu0 0
  %2096 = vmatmul.mubr.bf16.gmra.mrb[0].mxu0 %v1991
  %v2097 = vpop.f32.mrb[0].mxu0
  %v2098 = vadd.f32 %v2013, %v2097
  %v2099 = vpop.f32.mrb[0].mxu0
  %v2100 = vpop.f32.mrb[0].mxu0
  %v2101 = vpop.f32.mrb[0].mxu0
  %2102 = vdwg.mxu0
  %2103 = vst [vmem:[%s11] sm:$0xff] %v2098
  // Predicated region
  $region46: #{net_forward.1} parent=0 // pred_check
    _
  $region47: #{net_forward.1} parent=0 // pred_check_branch
    %2105 = sbr.rel (0) target = $region49
  $region48: #{net_forward.1} parent=0 // pred_region
    _
  $region49: #{net_forward.1} parent=0 // pred_fallthru
    _
  // Predicated region
  $region50: #{net_forward.1} parent=0 // pred_check
    _
  $region51: #{net_forward.1} parent=0 // pred_check_branch
    %2107 = sbr.rel (0) target = $region53
  $region52: #{net_forward.1} parent=0 // pred_region
    _
  $region53: #{net_forward.1} parent=0 // pred_fallthru
    _

</llo_original>
